<compile_context>
chip_gen: v7x
topology: tpu7x:2x2x1
jax: 0.10.0
libtpu: 0.0.40
codegen_flags: <defaults>
</compile_context>

<pallas_src>
import functools

import jax
import jax.numpy as jnp
from jax.experimental import pallas as pl
from jax.experimental.pallas import tpu as pltpu


def _round_up(a, m):
    return ((a + m - 1) // m) * m


def _decoder_kernel(
    x_ref,
    w14_ref, b14_ref,      # (in, 2H)            : fc1 || fc4
    w25_ref, b25_ref,      # (2H, 2H)            : blockdiag(fc2, fc5)
    wout_ref, bout_ref,    # (2H, out1 + 3*out2) : blockdiag(fc3, [fc6|fc7|fc8])
    out_ref, p1_ref, p2_ref, p3_ref,
    *, out_dim1, out_dim2,
):
    def linear(v_bf16, w_ref, b_ref):
        # bf16 x bf16 on the MXU, f32 accumulation, f32 bias add.
        return (
            jnp.dot(v_bf16, w_ref[...], preferred_element_type=jnp.float32)
            + b_ref[...]
        )

    x = x_ref[...].astype(jnp.bfloat16)

    # layer 1 (both branches in one matmul), layer 2 (block-diagonal -> no
    # 64-lane split of h), layer 3 (block-diagonal -> single matmul emits the
    # packed out||logits row).
    h = jnp.maximum(linear(x, w14_ref, b14_ref), 0.0).astype(jnp.bfloat16)
    h = jnp.maximum(linear(h, w25_ref, b25_ref), 0.0).astype(jnp.bfloat16)
    z = linear(h, wout_ref, bout_ref)            # (tile_b, out1 + 3*out2) f32

    out_ref[...] = z[:, :out_dim1].astype(out_ref.dtype)

    # Three tiny (<= 8 lane wide) softmaxes on static lane slices of z.
    # Exact reciprocal (EUP) so each probability row sums to 1.
    for j, p_ref in enumerate((p1_ref, p2_ref, p3_ref)):
        lo = out_dim1 + j * out_dim2
        zj = z[:, lo:lo + out_dim2]
        m = jnp.max(zj, axis=-1, keepdims=True)
        e = jnp.exp(zj - m)
        s = jnp.sum(e, axis=-1, keepdims=True)
        p_ref[...] = (e * pl.reciprocal(s, approx=False)).astype(p_ref.dtype)


def pack_decoder_params(params):
    """One-time (outside jit) packing: fuse sibling layers into block-diagonal
    weights and cast weights to bf16 (biases stay f32)."""
    bf16 = jnp.bfloat16
    f32 = jnp.float32
    H = params["fc2_w"].shape[0]
    o1 = params["fc3_w"].shape[1]
    o2 = params["fc6_w"].shape[1]

    zHH = jnp.zeros((H, H), f32)
    w25 = jnp.block([[params["fc2_w"], zHH],
                     [zHH, params["fc5_w"]]])

    w678 = jnp.concatenate(
        [params["fc6_w"], params["fc7_w"], params["fc8_w"]], axis=1)
    wout = jnp.block([[params["fc3_w"], jnp.zeros((H, 3 * o2), f32)],
                      [jnp.zeros((H, o1), f32), w678]])

    return {
        "w14": jnp.concatenate(
            [params["fc1_w"], params["fc4_w"]], axis=1).astype(bf16),
        "b14": jnp.concatenate([params["fc1_b"], params["fc4_b"]], axis=1),
        "w25": w25.astype(bf16),
        "b25": jnp.concatenate([params["fc2_b"], params["fc5_b"]], axis=1),
        "wout": wout.astype(bf16),
        "bout": jnp.concatenate(
            [params["fc3_b"], params["fc6_b"],
             params["fc7_b"], params["fc8_b"]], axis=1),
    }


@functools.partial(jax.jit, static_argnames=("out_dim1", "out_dim2"))
def decoder_forward(x, packed, *, out_dim1, out_dim2):
    """x: (B, input_dim) float32. packed: output of pack_decoder_params.
    Returns (out, prob1, prob2, prob3), all float32."""
    B, input_dim = x.shape
    total_out = packed["wout"].shape[1]
    assert total_out == out_dim1 + 3 * out_dim2

    # tile_b policy: ~1024-row blocks, but always >= 2 grid steps once B > 8 so
    # the batch axis can be split across v7x's 2 TensorCores and the BlockSpec
    # pipeline has something to overlap.  No input padding: the ragged trailing
    # block (if any) is read/write-masked by Pallas.
    if B <= 8:
        tile_b = 8
    else:
        n_target = max(2, (B + 1023) // 1024)
        tile_b = _round_up((B + n_target - 1) // n_target, 8)
    nb = (B + tile_b - 1) // tile_b

    kern = functools.partial(
        _decoder_kernel, out_dim1=out_dim1, out_dim2=out_dim2)

    def wspec(arr):
        # full-array block, constant block index -> VMEM-resident weights
        return pl.BlockSpec(arr.shape, lambda i: (0, 0))

    def ospec(n):
        return pl.BlockSpec((tile_b, n), lambda i: (i, 0))

    out, p1, p2, p3 = pl.pallas_call(
        kern,
        out_shape=(
            jax.ShapeDtypeStruct((B, out_dim1), jnp.float32),
            jax.ShapeDtypeStruct((B, out_dim2), jnp.float32),
            jax.ShapeDtypeStruct((B, out_dim2), jnp.float32),
            jax.ShapeDtypeStruct((B, out_dim2), jnp.float32),
        ),
        grid=(nb,),
        in_specs=[
            pl.BlockSpec((tile_b, input_dim), lambda i: (i, 0)),
            wspec(packed["w14"]), wspec(packed["b14"]),
            wspec(packed["w25"]), wspec(packed["b25"]),
            wspec(packed["wout"]), wspec(packed["bout"]),
        ],
        out_specs=(ospec(out_dim1), ospec(out_dim2),
                   ospec(out_dim2), ospec(out_dim2)),
        compiler_params=pltpu.CompilerParams(
            dimension_semantics=("parallel",)),
    )(
        x,
        packed["w14"], packed["b14"],
        packed["w25"], packed["b25"],
        packed["wout"], packed["bout"],
    )
    return out, p1, p2, p3


def init_decoder_params(key, input_dim, hidden_dim, output_dim1, output_dim2):
    """Deterministic init mimicking nn.Linear default (uniform +/- 1/sqrt(fan_in)).
    Weights stored as (in_features, out_features), f32."""
    dims = {
        1: (input_dim, hidden_dim),
        2: (hidden_dim, hidden_dim),
        3: (hidden_dim, output_dim1),
        4: (input_dim, hidden_dim),
        5: (hidden_dim, hidden_dim),
        6: (hidden_dim, output_dim2),
        7: (hidden_dim, output_dim2),
        8: (hidden_dim, output_dim2),
    }
    params = {}
    keys = jax.random.split(key, 16)
    for i in range(1, 9):
        fan_in, fan_out = dims[i]
        bound = 1.0 / (fan_in ** 0.5)
        params[f"fc{i}_w"] = jax.random.uniform(
            keys[2 * (i - 1)], (fan_in, fan_out), jnp.float32, -bound, bound)
        params[f"fc{i}_b"] = jax.random.uniform(
            keys[2 * (i - 1) + 1], (1, fan_out), jnp.float32, -bound, bound)
    return params


def _reference_forward(x, params):
    # pure-JAX reference using the same bf16-weight / f32-accumulate math
    def lin(v, i):
        w = params[f"fc{i}_w"].astype(jnp.bfloat16)
        return (
            jnp.dot(v.astype(jnp.bfloat16), w,
                    preferred_element_type=jnp.float32)
            + params[f"fc{i}_b"]
        )

    h1 = jax.nn.relu(lin(x, 1))
    h1 = jax.nn.relu(lin(h1, 2))
    out = lin(h1, 3)
    h2 = jax.nn.relu(lin(x, 4))
    h2 = jax.nn.relu(lin(h2, 5))
    p1 = jax.nn.softmax(lin(h2, 6), axis=-1)
    p2 = jax.nn.softmax(lin(h2, 7), axis=-1)
    p3 = jax.nn.softmax(lin(h2, 8), axis=-1)
    return out, p1, p2, p3


if __name__ == "__main__":
    # small shapes consistent with the module; B=24 exercises a 2-step grid
    # with a ragged (write-masked) trailing block.
    B, INPUT_DIM, HIDDEN_DIM, OUT_DIM1, OUT_DIM2 = 24, 32, 64, 16, 8

    key = jax.random.PRNGKey(0)
    k_params, k_x = jax.random.split(key)
    params = init_decoder_params(
        k_params, INPUT_DIM, HIDDEN_DIM, OUT_DIM1, OUT_DIM2)
    packed = pack_decoder_params(params)
    x = jax.random.normal(k_x, (B, INPUT_DIM), dtype=jnp.float32)

    outs = decoder_forward(x, packed, out_dim1=OUT_DIM1, out_dim2=OUT_DIM2)
    outs = jax.block_until_ready(outs)

    # correctness check against pure-JAX reference (same bf16 weight math)
    refs = _reference_forward(x, params)
    names = ("out", "prob1", "prob2", "prob3")
    for name, got, ref in zip(names, outs, refs):
        assert got.shape == ref.shape, (name, got.shape, ref.shape)
        err = float(jnp.max(jnp.abs(got - ref)))
        assert err < 2e-3, (name, err)
    # probability rows must sum to ~1 (exact reciprocal in the kernel)
    for p in outs[1:]:
        assert float(jnp.max(jnp.abs(jnp.sum(p, axis=-1) - 1.0))) < 1e-3

    print("KERNEL_OK")
</pallas_src>

<mosaic_0001>
module attributes {stable_mosaic.version = 11 : i64} {
  func.func @_decoder_kernel(%arg0: i32, %arg1: memref<16x32xf32, #tpu.memory_space<vmem>>, %arg2: memref<32x128xbf16, #tpu.memory_space<vmem>>, %arg3: memref<1x128xf32, #tpu.memory_space<vmem>>, %arg4: memref<128x128xbf16, #tpu.memory_space<vmem>>, %arg5: memref<1x128xf32, #tpu.memory_space<vmem>>, %arg6: memref<128x40xbf16, #tpu.memory_space<vmem>>, %arg7: memref<1x40xf32, #tpu.memory_space<vmem>>, %arg8: memref<16x16xf32, #tpu.memory_space<vmem>>, %arg9: memref<16x8xf32, #tpu.memory_space<vmem>>, %arg10: memref<16x8xf32, #tpu.memory_space<vmem>>, %arg11: memref<16x8xf32, #tpu.memory_space<vmem>>) attributes {dimension_semantics = [#tpu.dimension_semantics<parallel>], iteration_bounds = array<i64: 2>, scalar_prefetch = 0 : i64, scratch_operands = 0 : i64, tpu.core_type = #tpu.core_type<tc>, window_params = [{transform_indices = @transform_0, window_bounds = array<i64: 16, 32>}, {pipeline_mode = #tpu.pipeline_mode<synchronous>, transform_indices = @transform_1, window_bounds = array<i64: 32, 128>}, {pipeline_mode = #tpu.pipeline_mode<synchronous>, transform_indices = @transform_2, window_bounds = array<i64: 1, 128>}, {pipeline_mode = #tpu.pipeline_mode<synchronous>, transform_indices = @transform_3, window_bounds = array<i64: 128, 128>}, {pipeline_mode = #tpu.pipeline_mode<synchronous>, transform_indices = @transform_4, window_bounds = array<i64: 1, 128>}, {pipeline_mode = #tpu.pipeline_mode<synchronous>, transform_indices = @transform_5, window_bounds = array<i64: 128, 40>}, {pipeline_mode = #tpu.pipeline_mode<synchronous>, transform_indices = @transform_6, window_bounds = array<i64: 1, 40>}, {transform_indices = @transform_7, window_bounds = array<i64: 16, 16>}, {transform_indices = @transform_8, window_bounds = array<i64: 16, 8>}, {transform_indices = @transform_9, window_bounds = array<i64: 16, 8>}, {transform_indices = @transform_10, window_bounds = array<i64: 16, 8>}]} {
    %c0 = arith.constant 0 : index
    %c0_0 = arith.constant 0 : index
    %0 = vector.load %arg1[%c0, %c0_0] : memref<16x32xf32, #tpu.memory_space<vmem>>, vector<16x32xf32>
    %1 = arith.truncf %0 : vector<16x32xf32> to vector<16x32xbf16>
    %c0_1 = arith.constant 0 : index
    %c0_2 = arith.constant 0 : index
    %2 = vector.load %arg2[%c0_1, %c0_2] : memref<32x128xbf16, #tpu.memory_space<vmem>>, vector<32x128xbf16>
    %cst = arith.constant dense<0.000000e+00> : vector<16x128xf32>
    %3 = tpu.matmul %1, %2, %cst {dimension_numbers = #tpu.dot_dimension_numbers<[1], [0], [0], [1], [0, 0, 1, 1], [], []>} : vector<16x32xbf16>, vector<32x128xbf16>, vector<16x128xf32> -> vector<16x128xf32>
    %c0_3 = arith.constant 0 : index
    %c0_4 = arith.constant 0 : index
    %4 = vector.load %arg3[%c0_3, %c0_4] : memref<1x128xf32, #tpu.memory_space<vmem>>, vector<1x128xf32>
    %5 = vector.broadcast %4 : vector<1x128xf32> to vector<16x128xf32>
    %6 = arith.addf %3, %5 : vector<16x128xf32>
    %cst_5 = arith.constant 0.000000e+00 : f32
    %7 = vector.broadcast %cst_5 : f32 to vector<16x128xf32>
    %8 = arith.maximumf %6, %7 : vector<16x128xf32>
    %9 = arith.truncf %8 : vector<16x128xf32> to vector<16x128xbf16>
    %c0_6 = arith.constant 0 : index
    %c0_7 = arith.constant 0 : index
    %10 = vector.load %arg4[%c0_6, %c0_7] : memref<128x128xbf16, #tpu.memory_space<vmem>>, vector<128x128xbf16>
    %cst_8 = arith.constant dense<0.000000e+00> : vector<16x128xf32>
    %11 = tpu.matmul %9, %10, %cst_8 {dimension_numbers = #tpu.dot_dimension_numbers<[1], [0], [0], [1], [0, 0, 1, 1], [], []>} : vector<16x128xbf16>, vector<128x128xbf16>, vector<16x128xf32> -> vector<16x128xf32>
    %c0_9 = arith.constant 0 : index
    %c0_10 = arith.constant 0 : index
    %12 = vector.load %arg5[%c0_9, %c0_10] : memref<1x128xf32, #tpu.memory_space<vmem>>, vector<1x128xf32>
    %13 = vector.broadcast %12 : vector<1x128xf32> to vector<16x128xf32>
    %14 = arith.addf %11, %13 : vector<16x128xf32>
    %cst_11 = arith.constant 0.000000e+00 : f32
    %15 = vector.broadcast %cst_11 : f32 to vector<16x128xf32>
    %16 = arith.maximumf %14, %15 : vector<16x128xf32>
    %17 = arith.truncf %16 : vector<16x128xf32> to vector<16x128xbf16>
    %c0_12 = arith.constant 0 : index
    %c0_13 = arith.constant 0 : index
    %18 = vector.load %arg6[%c0_12, %c0_13] : memref<128x40xbf16, #tpu.memory_space<vmem>>, vector<128x40xbf16>
    %cst_14 = arith.constant dense<0.000000e+00> : vector<16x40xf32>
    %19 = tpu.matmul %17, %18, %cst_14 {dimension_numbers = #tpu.dot_dimension_numbers<[1], [0], [0], [1], [0, 0, 1, 1], [], []>} : vector<16x128xbf16>, vector<128x40xbf16>, vector<16x40xf32> -> vector<16x40xf32>
    %c0_15 = arith.constant 0 : index
    %c0_16 = arith.constant 0 : index
    %20 = vector.load %arg7[%c0_15, %c0_16] : memref<1x40xf32, #tpu.memory_space<vmem>>, vector<1x40xf32>
    %21 = vector.broadcast %20 : vector<1x40xf32> to vector<16x40xf32>
    %22 = arith.addf %19, %21 : vector<16x40xf32>
    %23 = vector.extract_strided_slice %22 {offsets = [0, 0], sizes = [16, 16], strides = [1, 1]} : vector<16x40xf32> to vector<16x16xf32>
    %c0_17 = arith.constant 0 : index
    %c0_18 = arith.constant 0 : index
    %24 = vector.load %arg8[%c0_17, %c0_18] : memref<16x16xf32, #tpu.memory_space<vmem>>, vector<16x16xf32>
    tpu.vector_store %arg8[%c0_17, %c0_18], %23 {strides = array<i32>} : memref<16x16xf32, #tpu.memory_space<vmem>>, vector<16x16xf32>,
    %25 = vector.extract_strided_slice %22 {offsets = [0, 16], sizes = [16, 8], strides = [1, 1]} : vector<16x40xf32> to vector<16x8xf32>
    %cst_19 = arith.constant dense<0xFF800000> : vector<16xf32>
    %26 = vector.multi_reduction <maximumf>, %25, %cst_19 [1] : vector<16x8xf32> to vector<16xf32>
    %27 = vector.shape_cast %26 : vector<16xf32> to vector<16x1xf32>
    %28 = vector.broadcast %27 : vector<16x1xf32> to vector<16x8xf32>
    %29 = arith.subf %25, %28 : vector<16x8xf32>
    %30 = math.exp %29 : vector<16x8xf32>
    %cst_20 = arith.constant dense<0.000000e+00> : vector<16xf32>
    %31 = vector.multi_reduction <add>, %30, %cst_20 [1] : vector<16x8xf32> to vector<16xf32>
    %32 = vector.shape_cast %31 : vector<16xf32> to vector<16x1xf32>
    %33 = tpu.reciprocal %32 : vector<16x1xf32> -> vector<16x1xf32>
    %34 = vector.broadcast %33 : vector<16x1xf32> to vector<16x8xf32>
    %35 = arith.mulf %30, %34 : vector<16x8xf32>
    %c0_21 = arith.constant 0 : index
    %c0_22 = arith.constant 0 : index
    %36 = vector.load %arg9[%c0_21, %c0_22] : memref<16x8xf32, #tpu.memory_space<vmem>>, vector<16x8xf32>
    tpu.vector_store %arg9[%c0_21, %c0_22], %35 {strides = array<i32>} : memref<16x8xf32, #tpu.memory_space<vmem>>, vector<16x8xf32>,
    %37 = vector.extract_strided_slice %22 {offsets = [0, 24], sizes = [16, 8], strides = [1, 1]} : vector<16x40xf32> to vector<16x8xf32>
    %cst_23 = arith.constant dense<0xFF800000> : vector<16xf32>
    %38 = vector.multi_reduction <maximumf>, %37, %cst_23 [1] : vector<16x8xf32> to vector<16xf32>
    %39 = vector.shape_cast %38 : vector<16xf32> to vector<16x1xf32>
    %40 = vector.broadcast %39 : vector<16x1xf32> to vector<16x8xf32>
    %41 = arith.subf %37, %40 : vector<16x8xf32>
    %42 = math.exp %41 : vector<16x8xf32>
    %cst_24 = arith.constant dense<0.000000e+00> : vector<16xf32>
    %43 = vector.multi_reduction <add>, %42, %cst_24 [1] : vector<16x8xf32> to vector<16xf32>
    %44 = vector.shape_cast %43 : vector<16xf32> to vector<16x1xf32>
    %45 = tpu.reciprocal %44 : vector<16x1xf32> -> vector<16x1xf32>
    %46 = vector.broadcast %45 : vector<16x1xf32> to vector<16x8xf32>
    %47 = arith.mulf %42, %46 : vector<16x8xf32>
    %c0_25 = arith.constant 0 : index
    %c0_26 = arith.constant 0 : index
    %48 = vector.load %arg10[%c0_25, %c0_26] : memref<16x8xf32, #tpu.memory_space<vmem>>, vector<16x8xf32>
    tpu.vector_store %arg10[%c0_25, %c0_26], %47 {strides = array<i32>} : memref<16x8xf32, #tpu.memory_space<vmem>>, vector<16x8xf32>,
    %49 = vector.extract_strided_slice %22 {offsets = [0, 32], sizes = [16, 8], strides = [1, 1]} : vector<16x40xf32> to vector<16x8xf32>
    %cst_27 = arith.constant dense<0xFF800000> : vector<16xf32>
    %50 = vector.multi_reduction <maximumf>, %49, %cst_27 [1] : vector<16x8xf32> to vector<16xf32>
    %51 = vector.shape_cast %50 : vector<16xf32> to vector<16x1xf32>
    %52 = vector.broadcast %51 : vector<16x1xf32> to vector<16x8xf32>
    %53 = arith.subf %49, %52 : vector<16x8xf32>
    %54 = math.exp %53 : vector<16x8xf32>
    %cst_28 = arith.constant dense<0.000000e+00> : vector<16xf32>
    %55 = vector.multi_reduction <add>, %54, %cst_28 [1] : vector<16x8xf32> to vector<16xf32>
    %56 = vector.shape_cast %55 : vector<16xf32> to vector<16x1xf32>
    %57 = tpu.reciprocal %56 : vector<16x1xf32> -> vector<16x1xf32>
    %58 = vector.broadcast %57 : vector<16x1xf32> to vector<16x8xf32>
    %59 = arith.mulf %54, %58 : vector<16x8xf32>
    %c0_29 = arith.constant 0 : index
    %c0_30 = arith.constant 0 : index
    %60 = vector.load %arg11[%c0_29, %c0_30] : memref<16x8xf32, #tpu.memory_space<vmem>>, vector<16x8xf32>
    tpu.vector_store %arg11[%c0_29, %c0_30], %59 {strides = array<i32>} : memref<16x8xf32, #tpu.memory_space<vmem>>, vector<16x8xf32>,
    return
  }
  func.func @transform_0(%arg0: i32) -> (i32, i32) {
    %c0_i32 = arith.constant 0 : i32
    %c0_i32_0 = arith.constant 0 : i32
    return %arg0, %c0_i32 : i32, i32
  }
  func.func @transform_1(%arg0: i32) -> (i32, i32) {
    %c0_i32 = arith.constant 0 : i32
    %c0_i32_0 = arith.constant 0 : i32
    %c0_i32_1 = arith.constant 0 : i32
    return %c0_i32, %c0_i32_0 : i32, i32
  }
  func.func @transform_2(%arg0: i32) -> (i32, i32) {
    %c0_i32 = arith.constant 0 : i32
    %c0_i32_0 = arith.constant 0 : i32
    %c0_i32_1 = arith.constant 0 : i32
    return %c0_i32, %c0_i32_0 : i32, i32
  }
  func.func @transform_3(%arg0: i32) -> (i32, i32) {
    %c0_i32 = arith.constant 0 : i32
    %c0_i32_0 = arith.constant 0 : i32
    %c0_i32_1 = arith.constant 0 : i32
    return %c0_i32, %c0_i32_0 : i32, i32
  }
  func.func @transform_4(%arg0: i32) -> (i32, i32) {
    %c0_i32 = arith.constant 0 : i32
    %c0_i32_0 = arith.constant 0 : i32
    %c0_i32_1 = arith.constant 0 : i32
    return %c0_i32, %c0_i32_0 : i32, i32
  }
  func.func @transform_5(%arg0: i32) -> (i32, i32) {
    %c0_i32 = arith.constant 0 : i32
    %c0_i32_0 = arith.constant 0 : i32
    %c0_i32_1 = arith.constant 0 : i32
    return %c0_i32, %c0_i32_0 : i32, i32
  }
  func.func @transform_6(%arg0: i32) -> (i32, i32) {
    %c0_i32 = arith.constant 0 : i32
    %c0_i32_0 = arith.constant 0 : i32
    %c0_i32_1 = arith.constant 0 : i32
    return %c0_i32, %c0_i32_0 : i32, i32
  }
  func.func @transform_7(%arg0: i32) -> (i32, i32) {
    %c0_i32 = arith.constant 0 : i32
    %c0_i32_0 = arith.constant 0 : i32
    return %arg0, %c0_i32 : i32, i32
  }
  func.func @transform_8(%arg0: i32) -> (i32, i32) {
    %c0_i32 = arith.constant 0 : i32
    %c0_i32_0 = arith.constant 0 : i32
    return %arg0, %c0_i32 : i32, i32
  }
  func.func @transform_9(%arg0: i32) -> (i32, i32) {
    %c0_i32 = arith.constant 0 : i32
    %c0_i32_0 = arith.constant 0 : i32
    return %arg0, %c0_i32 : i32, i32
  }
  func.func @transform_10(%arg0: i32) -> (i32, i32) {
    %c0_i32 = arith.constant 0 : i32
    %c0_i32_0 = arith.constant 0 : i32
    return %arg0, %c0_i32 : i32, i32
  }
}

</mosaic_0001>

<llo_original>
// kernel: decoder_forward.1
$region0: #{decoder_forward.1}
  #allocation0 [shape = 'u32[]', space=smem, size = 0x4, offset = 0x4, fixed_abs, tag = 'smem constant byte address 0x4 - core index']
  #allocation1 [shape = 'u32[144,128]{1,0:T(1,128)}', space=vmem, size = 0x12000, scoped, tag = 'internal scratch']
  %s0 = inlined_call_operand.vmem [shape: f32[24,32], index: 0, kind: input, shape index: {}]
  %s1 = inlined_call_operand.hbm [shape: bf16[32,128], index: 1, kind: input, shape index: {}]
  %s2 = inlined_call_operand.vmem [shape: f32[1,128], index: 2, kind: input, shape index: {}]
  %s3 = inlined_call_operand.vmem [shape: bf16[128,128], index: 3, kind: input, shape index: {}]
  %s4 = inlined_call_operand.vmem [shape: f32[1,128], index: 4, kind: input, shape index: {}]
  %s5 = inlined_call_operand.vmem [shape: bf16[128,40], index: 5, kind: input, shape index: {}]
  %s6 = inlined_call_operand.vmem [shape: f32[1,40], index: 6, kind: input, shape index: {}]
  %s7 = inlined_call_operand.vmem [shape: f32[24,16], index: 7, kind: output, shape index: {0}]
  %s8 = inlined_call_operand.vmem [shape: f32[24,8], index: 8, kind: output, shape index: {1}]
  %s9 = inlined_call_operand.vmem [shape: f32[24,8], index: 9, kind: output, shape index: {2}]
  %s10 = inlined_call_operand.vmem [shape: f32[24,8], index: 10, kind: output, shape index: {3}]
  %11 = xla_tuple %s7, %s8, %s9, %s10
  %s12 = sld [smem:[#allocation0]]
  $region281: #{decoder_forward.1} parent=0
    _
  %s14 = ssub.s32 1, %s12
  %s15 = scalar_select 0, %s14, %s12
  $region1: #{decoder_forward.1} parent=0
    #allocation2 [shape = 'u8[8192]{0}', space=vmem, size = 0x2000, scoped, tag = 'input window, operand 1, single buffered']
    #allocation3 [shape = 's32[2]{0}', space=sflag, size = 0x8, scoped, tag = 'scoped memory for decoder_forward.1']
    #allocation4 [shape = 'u8[16384]{0}', space=vmem, size = 0x4000, scoped, tag = 'output window, operand 0']
    #allocation5 [shape = 'u8[16384]{0}', space=vmem, size = 0x4000, scoped, tag = 'output window, operand 1']
    #allocation6 [shape = 'u8[16384]{0}', space=vmem, size = 0x4000, scoped, tag = 'output window, operand 2']
    #allocation7 [shape = 'u8[16384]{0}', space=vmem, size = 0x4000, scoped, tag = 'output window, operand 3']
    %16 = vsyncpa [#allocation3], 0
    loop: start=0, step=1, limit=4
    $region2: #{decoder_forward.1} parent=1 // loop_pre_header
      _
    $region3: #{decoder_forward.1} parent=1 // loop_header
      %s18 = sphi 0, %s22
      %p19 = scmp.ge.s32.totalorder %s18, 4
      %s28 = sphi 0, %s30
      %s31 = sphi 0, %s28
      %s32 = sphi 0, %s31
      %s48 = sphi 0, %s32
      %s52 = sphi 0, %s52
      %s54 = sphi 0, %s52
      %s55 = sphi 0, %s54
      %s69 = sphi 0, %s55
      %s73 = sphi 0, %s73
      %s75 = sphi 0, %s73
      %s76 = sphi 0, %s75
      %s90 = sphi 0, %s76
      %s94 = sphi 0, %s94
      %s96 = sphi 0, %s94
      %s97 = sphi 0, %s96
      %s111 = sphi 0, %s97
      %s115 = sphi 0, %s115
      %s117 = sphi 0, %s115
      %s118 = sphi 0, %s117
      %s132 = sphi 0, %s118
      %s136 = sphi 0, %s136
      %s138 = sphi 0, %s136
      %s139 = sphi 0, %s138
      %s153 = sphi 0, %s139
      %s157 = sphi 0, %s157
      %s159 = sphi 0, %s157
      %s160 = sphi 0, %s159
      %s174 = sphi 0, %s160
      %s180 = sphi 0, %s182
      %s183 = sphi 0, %s180
      %s184 = sphi 0, %s183
      %s200 = sphi 0, %s184
      %s206 = sphi 0, %s208
      %s209 = sphi 0, %s206
      %s210 = sphi 0, %s209
      %s226 = sphi 0, %s210
      %s232 = sphi 0, %s234
      %s235 = sphi 0, %s232
      %s236 = sphi 0, %s235
      %s252 = sphi 0, %s236
      %s258 = sphi 0, %s260
      %s261 = sphi 0, %s258
      %s262 = sphi 0, %s261
      %s278 = sphi 0, %s262
    $region4: #{decoder_forward.1} parent=1 // loop_header_branch
      %21 = sbr.rel (%p19) target = $region8
    $region5: #{decoder_forward.1} parent=1 // loop_body
      %s23 = ssub.s32 %s18, 1
      %s24 = ssub.s32 %s18, 2
      %s25 = sadd.s32 %s18, 1
      %s26 = ssub.s32 %s18, %s25
      %p27 = scmp.eq.s32.totalorder %s26, 0
      %s29 = sadd.s32 %s28, 1
      %s30 = scalar_select %p27, %s28, %s29
      %p33 = pneg %p27
      %p34 = scmp.eq.s32.totalorder %s18, 1
      %p35 = por %p33, %p34
      %p36 = scmp.ne.s32.totalorder %s28, %s31
      %p37 = scmp.eq.s32.totalorder %s18, 0
      %p38 = por %p36, %p37
      %p39 = scmp.ne.s32.totalorder %s28, %s31
      %p40 = scmp.eq.s32.totalorder %s23, 1
      %p41 = por %p39, %p40
      %p42 = scmp.ne.s32.totalorder %s31, %s32
      %p43 = scmp.eq.s32.totalorder %s23, 0
      %p44 = por %p42, %p43
      %p45 = scmp.ne.s32.totalorder %s31, %s32
      %p46 = scmp.eq.s32.totalorder %s24, 1
      %p47 = por %p45, %p46
      %p49 = scmp.ne.s32.totalorder %s32, %s48
      %p50 = scmp.eq.s32.totalorder %s24, 0
      %p51 = por %p49, %p50
      %s53 = sadd.s32 %s52, 1
      %p56 = scmp.eq.s32.totalorder %s18, 1
      %p57 = scmp.ne.s32.totalorder %s52, %s54
      %p58 = scmp.eq.s32.totalorder %s18, 0
      %p59 = por %p57, %p58
      %p60 = scmp.ne.s32.totalorder %s52, %s54
      %p61 = scmp.eq.s32.totalorder %s23, 1
      %p62 = por %p60, %p61
      %p63 = scmp.ne.s32.totalorder %s54, %s55
      %p64 = scmp.eq.s32.totalorder %s23, 0
      %p65 = por %p63, %p64
      %p66 = scmp.ne.s32.totalorder %s54, %s55
      %p67 = scmp.eq.s32.totalorder %s24, 1
      %p68 = por %p66, %p67
      %p70 = scmp.ne.s32.totalorder %s55, %s69
      %p71 = scmp.eq.s32.totalorder %s24, 0
      %p72 = por %p70, %p71
      %s74 = sadd.s32 %s73, 1
      %p77 = scmp.eq.s32.totalorder %s18, 1
      %p78 = scmp.ne.s32.totalorder %s73, %s75
      %p79 = scmp.eq.s32.totalorder %s18, 0
      %p80 = por %p78, %p79
      %p81 = scmp.ne.s32.totalorder %s73, %s75
      %p82 = scmp.eq.s32.totalorder %s23, 1
      %p83 = por %p81, %p82
      %p84 = scmp.ne.s32.totalorder %s75, %s76
      %p85 = scmp.eq.s32.totalorder %s23, 0
      %p86 = por %p84, %p85
      %p87 = scmp.ne.s32.totalorder %s75, %s76
      %p88 = scmp.eq.s32.totalorder %s24, 1
      %p89 = por %p87, %p88
      %p91 = scmp.ne.s32.totalorder %s76, %s90
      %p92 = scmp.eq.s32.totalorder %s24, 0
      %p93 = por %p91, %p92
      %s95 = sadd.s32 %s94, 1
      %p98 = scmp.eq.s32.totalorder %s18, 1
      %p99 = scmp.ne.s32.totalorder %s94, %s96
      %p100 = scmp.eq.s32.totalorder %s18, 0
      %p101 = por %p99, %p100
      %p102 = scmp.ne.s32.totalorder %s94, %s96
      %p103 = scmp.eq.s32.totalorder %s23, 1
      %p104 = por %p102, %p103
      %p105 = scmp.ne.s32.totalorder %s96, %s97
      %p106 = scmp.eq.s32.totalorder %s23, 0
      %p107 = por %p105, %p106
      %p108 = scmp.ne.s32.totalorder %s96, %s97
      %p109 = scmp.eq.s32.totalorder %s24, 1
      %p110 = por %p108, %p109
      %p112 = scmp.ne.s32.totalorder %s97, %s111
      %p113 = scmp.eq.s32.totalorder %s24, 0
      %p114 = por %p112, %p113
      %s116 = sadd.s32 %s115, 1
      %p119 = scmp.eq.s32.totalorder %s18, 1
      %p120 = scmp.ne.s32.totalorder %s115, %s117
      %p121 = scmp.eq.s32.totalorder %s18, 0
      %p122 = por %p120, %p121
      %p123 = scmp.ne.s32.totalorder %s115, %s117
      %p124 = scmp.eq.s32.totalorder %s23, 1
      %p125 = por %p123, %p124
      %p126 = scmp.ne.s32.totalorder %s117, %s118
      %p127 = scmp.eq.s32.totalorder %s23, 0
      %p128 = por %p126, %p127
      %p129 = scmp.ne.s32.totalorder %s117, %s118
      %p130 = scmp.eq.s32.totalorder %s24, 1
      %p131 = por %p129, %p130
      %p133 = scmp.ne.s32.totalorder %s118, %s132
      %p134 = scmp.eq.s32.totalorder %s24, 0
      %p135 = por %p133, %p134
      %s137 = sadd.s32 %s136, 1
      %p140 = scmp.eq.s32.totalorder %s18, 1
      %p141 = scmp.ne.s32.totalorder %s136, %s138
      %p142 = scmp.eq.s32.totalorder %s18, 0
      %p143 = por %p141, %p142
      %p144 = scmp.ne.s32.totalorder %s136, %s138
      %p145 = scmp.eq.s32.totalorder %s23, 1
      %p146 = por %p144, %p145
      %p147 = scmp.ne.s32.totalorder %s138, %s139
      %p148 = scmp.eq.s32.totalorder %s23, 0
      %p149 = por %p147, %p148
      %p150 = scmp.ne.s32.totalorder %s138, %s139
      %p151 = scmp.eq.s32.totalorder %s24, 1
      %p152 = por %p150, %p151
      %p154 = scmp.ne.s32.totalorder %s139, %s153
      %p155 = scmp.eq.s32.totalorder %s24, 0
      %p156 = por %p154, %p155
      %s158 = sadd.s32 %s157, 1
      %p161 = scmp.eq.s32.totalorder %s18, 1
      %p162 = scmp.ne.s32.totalorder %s157, %s159
      %p163 = scmp.eq.s32.totalorder %s18, 0
      %p164 = por %p162, %p163
      %p165 = scmp.ne.s32.totalorder %s157, %s159
      %p166 = scmp.eq.s32.totalorder %s23, 1
      %p167 = por %p165, %p166
      %p168 = scmp.ne.s32.totalorder %s159, %s160
      %p169 = scmp.eq.s32.totalorder %s23, 0
      %p170 = por %p168, %p169
      %p171 = scmp.ne.s32.totalorder %s159, %s160
      %p172 = scmp.eq.s32.totalorder %s24, 1
      %p173 = por %p171, %p172
      %p175 = scmp.ne.s32.totalorder %s160, %s174
      %p176 = scmp.eq.s32.totalorder %s24, 0
      %p177 = por %p175, %p176
      %s178 = ssub.s32 %s18, %s25
      %p179 = scmp.eq.s32.totalorder %s178, 0
      %s181 = sadd.s32 %s180, 1
      %s182 = scalar_select %p179, %s180, %s181
      %p185 = pneg %p179
      %p186 = scmp.eq.s32.totalorder %s18, 1
      %p187 = por %p185, %p186
      %p188 = scmp.ne.s32.totalorder %s180, %s183
      %p189 = scmp.eq.s32.totalorder %s18, 0
      %p190 = por %p188, %p189
      %p191 = scmp.ne.s32.totalorder %s180, %s183
      %p192 = scmp.eq.s32.totalorder %s23, 1
      %p193 = por %p191, %p192
      %p194 = scmp.ne.s32.totalorder %s183, %s184
      %p195 = scmp.eq.s32.totalorder %s23, 0
      %p196 = por %p194, %p195
      %p197 = scmp.ne.s32.totalorder %s183, %s184
      %p198 = scmp.eq.s32.totalorder %s24, 1
      %p199 = por %p197, %p198
      %p201 = scmp.ne.s32.totalorder %s184, %s200
      %p202 = scmp.eq.s32.totalorder %s24, 0
      %p203 = por %p201, %p202
      %s204 = ssub.s32 %s18, %s25
      %p205 = scmp.eq.s32.totalorder %s204, 0
      %s207 = sadd.s32 %s206, 1
      %s208 = scalar_select %p205, %s206, %s207
      %p211 = pneg %p205
      %p212 = scmp.eq.s32.totalorder %s18, 1
      %p213 = por %p211, %p212
      %p214 = scmp.ne.s32.totalorder %s206, %s209
      %p215 = scmp.eq.s32.totalorder %s18, 0
      %p216 = por %p214, %p215
      %p217 = scmp.ne.s32.totalorder %s206, %s209
      %p218 = scmp.eq.s32.totalorder %s23, 1
      %p219 = por %p217, %p218
      %p220 = scmp.ne.s32.totalorder %s209, %s210
      %p221 = scmp.eq.s32.totalorder %s23, 0
      %p222 = por %p220, %p221
      %p223 = scmp.ne.s32.totalorder %s209, %s210
      %p224 = scmp.eq.s32.totalorder %s24, 1
      %p225 = por %p223, %p224
      %p227 = scmp.ne.s32.totalorder %s210, %s226
      %p228 = scmp.eq.s32.totalorder %s24, 0
      %p229 = por %p227, %p228
      %s230 = ssub.s32 %s18, %s25
      %p231 = scmp.eq.s32.totalorder %s230, 0
      %s233 = sadd.s32 %s232, 1
      %s234 = scalar_select %p231, %s232, %s233
      %p237 = pneg %p231
      %p238 = scmp.eq.s32.totalorder %s18, 1
      %p239 = por %p237, %p238
      %p240 = scmp.ne.s32.totalorder %s232, %s235
      %p241 = scmp.eq.s32.totalorder %s18, 0
      %p242 = por %p240, %p241
      %p243 = scmp.ne.s32.totalorder %s232, %s235
      %p244 = scmp.eq.s32.totalorder %s23, 1
      %p245 = por %p243, %p244
      %p246 = scmp.ne.s32.totalorder %s235, %s236
      %p247 = scmp.eq.s32.totalorder %s23, 0
      %p248 = por %p246, %p247
      %p249 = scmp.ne.s32.totalorder %s235, %s236
      %p250 = scmp.eq.s32.totalorder %s24, 1
      %p251 = por %p249, %p250
      %p253 = scmp.ne.s32.totalorder %s236, %s252
      %p254 = scmp.eq.s32.totalorder %s24, 0
      %p255 = por %p253, %p254
      %s256 = ssub.s32 %s18, %s25
      %p257 = scmp.eq.s32.totalorder %s256, 0
      %s259 = sadd.s32 %s258, 1
      %s260 = scalar_select %p257, %s258, %s259
      %p263 = pneg %p257
      %p264 = scmp.eq.s32.totalorder %s18, 1
      %p265 = por %p263, %p264
      %p266 = scmp.ne.s32.totalorder %s258, %s261
      %p267 = scmp.eq.s32.totalorder %s18, 0
      %p268 = por %p266, %p267
      %p269 = scmp.ne.s32.totalorder %s258, %s261
      %p270 = scmp.eq.s32.totalorder %s23, 1
      %p271 = por %p269, %p270
      %p272 = scmp.ne.s32.totalorder %s261, %s262
      %p273 = scmp.eq.s32.totalorder %s23, 0
      %p274 = por %p272, %p273
      %p275 = scmp.ne.s32.totalorder %s261, %s262
      %p276 = scmp.eq.s32.totalorder %s24, 1
      %p277 = por %p275, %p276
      %p279 = scmp.ne.s32.totalorder %s262, %s278
      %p280 = scmp.eq.s32.totalorder %s24, 0
      %p281 = por %p279, %p280
      %p282 = scmp.le.s32.totalorder 1, %s18
      %p283 = scmp.lt.s32.totalorder %s18, 3
      %p284 = pnand %p282, %p283
      %p285 = pneg %p284
      // Predicated region
      $region9: #{decoder_forward.1} parent=5 // pred_check
        _
      $region10: #{decoder_forward.1} parent=5 // pred_check_branch
        %287 = sbr.rel (%p284) target = $region12
      $region11: #{decoder_forward.1} parent=5 // pred_region
        %s288 = ssub.s32 %s18, 1
        // Predicated region
        $region13: #{decoder_forward.1} parent=11 // pred_check
          %p289 = pneg %p65
        $region14: #{decoder_forward.1} parent=11 // pred_check_branch
          %291 = sbr.rel (%p289) target = $region16
        $region15: #{decoder_forward.1} parent=11 // pred_region
          %s293 = ssub.s32 256, 256
          %294 = vsyncadd [#allocation3], %s293
          %s295 = sshll.u32 [#allocation2], 4
          %s296 = int_to_ptr.vmem [resolvable:$true] %s295
          %301 = dma.hbm_to_vmem [thread:$0]  %s1, 256, %s296, [#allocation3], 64, 64, 4
        $region16: #{decoder_forward.1} parent=11 // pred_fallthru
          _
        // Predicated region
        $region17: #{decoder_forward.1} parent=11 // pred_check
          %p302 = pneg %p86
        $region18: #{decoder_forward.1} parent=11 // pred_check_branch
          %304 = sbr.rel (%p302) target = $region20
        $region19: #{decoder_forward.1} parent=11 // pred_region
          _
        $region20: #{decoder_forward.1} parent=11 // pred_fallthru
          _
        // Predicated region
        $region21: #{decoder_forward.1} parent=11 // pred_check
          %p305 = pneg %p107
        $region22: #{decoder_forward.1} parent=11 // pred_check_branch
          %307 = sbr.rel (%p305) target = $region24
        $region23: #{decoder_forward.1} parent=11 // pred_region
          _
        $region24: #{decoder_forward.1} parent=11 // pred_fallthru
          _
        // Predicated region
        $region25: #{decoder_forward.1} parent=11 // pred_check
          %p308 = pneg %p128
        $region26: #{decoder_forward.1} parent=11 // pred_check_branch
          %310 = sbr.rel (%p308) target = $region28
        $region27: #{decoder_forward.1} parent=11 // pred_region
          _
        $region28: #{decoder_forward.1} parent=11 // pred_fallthru
          _
        // Predicated region
        $region29: #{decoder_forward.1} parent=11 // pred_check
          %p311 = pneg %p149
        $region30: #{decoder_forward.1} parent=11 // pred_check_branch
          %313 = sbr.rel (%p311) target = $region32
        $region31: #{decoder_forward.1} parent=11 // pred_region
          _
        $region32: #{decoder_forward.1} parent=11 // pred_fallthru
          _
        // Predicated region
        $region33: #{decoder_forward.1} parent=11 // pred_check
          %p314 = pneg %p170
        $region34: #{decoder_forward.1} parent=11 // pred_check_branch
          %316 = sbr.rel (%p314) target = $region36
        $region35: #{decoder_forward.1} parent=11 // pred_region
          _
        $region36: #{decoder_forward.1} parent=11 // pred_fallthru
          _
      $region12: #{decoder_forward.1} parent=5 // pred_fallthru
        _
      %p317 = scmp.lt.s32.totalorder %s18, 2
      // Predicated region
      $region37: #{decoder_forward.1} parent=5 // pred_check
        %p318 = pneg %p317
      $region38: #{decoder_forward.1} parent=5 // pred_check_branch
        %320 = sbr.rel (%p318) target = $region40
      $region39: #{decoder_forward.1} parent=5 // pred_region
        // Predicated region
        $region41: #{decoder_forward.1} parent=39 // pred_check
          %p321 = pneg %p38
        $region42: #{decoder_forward.1} parent=39 // pred_check_branch
          %323 = sbr.rel (%p321) target = $region44
        $region43: #{decoder_forward.1} parent=39 // pred_region
          %s324 = smul.u32 2, %s18
          %s325 = ssub.s32 3, %s324
          %p326 = scmp.lt.s32.totalorder %s325, 2
          %s327 = scalar_select %p326, %s325, 2
          %s328 = smul.u32 128, %s327
          %p329 = scmp.lt.s32.totalorder %s324, 2
          %s330 = scalar_select %p329, %s324, 2
          %s331 = smul.addr %s330, 8
          %s332 = scalar_lea.vmem %s0, %s331
          %s333 = smul.u32 2, %s18
          %s334 = ssub.s32 3, %s333
          %p335 = scmp.lt.s32.totalorder %s334, 2
          %s336 = scalar_select %p335, %s334, 2
          %s337 = smul.u32 128, %s336
        $region44: #{decoder_forward.1} parent=39 // pred_fallthru
          _
      $region40: #{decoder_forward.1} parent=5 // pred_fallthru
        _
      %p338 = scmp.le.s32.totalorder 1, %s18
      %p339 = scmp.lt.s32.totalorder %s18, 3
      %p340 = pnand %p338, %p339
      %p341 = pneg %p340
      // Predicated region
      $region45: #{decoder_forward.1} parent=5 // pred_check
        _
      $region46: #{decoder_forward.1} parent=5 // pred_check_branch
        %343 = sbr.rel (%p340) target = $region48
      $region47: #{decoder_forward.1} parent=5 // pred_region
        %s344 = ssub.s32 %s18, 1
        // Predicated region
        $region49: #{decoder_forward.1} parent=47 // pred_check
          %p345 = pneg %p65
        $region50: #{decoder_forward.1} parent=47 // pred_check_branch
          %347 = sbr.rel (%p345) target = $region52
        $region51: #{decoder_forward.1} parent=47 // pred_region
          %348 = dma.done [#allocation3], 256
        $region52: #{decoder_forward.1} parent=47 // pred_fallthru
          _
        %s349 = smul.u32 2, %s23
        %s350 = ssub.s32 3, %s349
        %p351 = scmp.lt.s32.totalorder %s350, 2
        %s352 = scalar_select %p351, %s350, 2
        %s353 = smul.u32 128, %s352
        %p354 = scmp.lt.s32.totalorder %s349, 2
        %s355 = scalar_select %p354, %s349, 2
        %s356 = smul.addr %s355, 8
        %s357 = scalar_lea.vmem %s0, %s356
        %p358 = pneg %p44
        %p359 = pneg %p41
        %p360 = pneg %p65
        %p361 = pneg %p62
        %p362 = pneg %p86
        %p363 = pneg %p83
        %p364 = pneg %p107
        %p365 = pneg %p104
        %p366 = pneg %p128
        %p367 = pneg %p125
        %p368 = pneg %p149
        %p369 = pneg %p146
        %p370 = pneg %p170
        %p371 = pneg %p167
        %p372 = pneg %p196
        %p373 = pneg %p193
        %s374 = sand.u32 %s183, 1
        %s375 = sand.u32 %s183, 1
        %s376 = smul.addr %s375, 16
        %s377 = scalar_lea.vmem [#allocation4], %s376
        %p378 = pneg %p222
        %p379 = pneg %p219
        %s380 = sand.u32 %s209, 1
        %s381 = sand.u32 %s209, 1
        %s382 = smul.addr %s381, 16
        %s383 = scalar_lea.vmem [#allocation5], %s382
        %p384 = pneg %p248
        %p385 = pneg %p245
        %s386 = sand.u32 %s235, 1
        %s387 = sand.u32 %s235, 1
        %s388 = smul.addr %s387, 16
        %s389 = scalar_lea.vmem [#allocation6], %s388
        %p390 = pneg %p274
        %p391 = pneg %p271
        %s392 = sand.u32 %s261, 1
        %s393 = sand.u32 %s261, 1
        %s394 = smul.addr %s393, 16
        %s395 = scalar_lea.vmem [#allocation7], %s394
        %s396 = smul.u32 2, %s23
        %s397 = ssub.s32 3, %s396
        %p398 = scmp.lt.s32.totalorder %s397, 2
        %s399 = scalar_select %p398, %s397, 2
        %s400 = smul.u32 128, %s399
        %p401 = scmp.lt.s32.totalorder %s396, 2
        %s402 = scalar_select %p401, %s396, 2
        %s403 = smul.addr %s402, 8
        %s404 = scalar_lea.vmem %s0, %s403
        %s405 = smul.u32 2, %s23
        %s406 = ssub.s32 3, %s405
        %p407 = scmp.lt.s32.totalorder %s406, 2
        %s408 = scalar_select %p407, %s406, 2
        %s409 = smul.u32 128, %s408
        %s410 = smul.u32 2, %s23
        %s411 = ssub.s32 3, %s410
        %p412 = scmp.lt.s32.totalorder %s411, 2
        %s413 = scalar_select %p412, %s411, 2
        %s414 = smul.u32 128, %s413
        %s415 = smul.u32 2, %s23
        %s416 = ssub.s32 3, %s415
        %p417 = scmp.lt.s32.totalorder %s416, 2
        %s418 = scalar_select %p417, %s416, 2
        %s419 = smul.u32 128, %s418
        %s420 = smul.u32 2, %s23
        %s421 = ssub.s32 3, %s420
        %p422 = scmp.lt.s32.totalorder %s421, 2
        %s423 = scalar_select %p422, %s421, 2
        %s424 = smul.u32 128, %s423
        %s425 = smul.u32 2, %s23
        %s426 = ssub.s32 3, %s425
        %p427 = scmp.lt.s32.totalorder %s426, 2
        %s428 = scalar_select %p427, %s426, 2
        %s429 = smul.u32 128, %s428
        %v431 = vld [vmem:[%s404] sm:$0xff]
        %v432 = vld [vmem:[%s404 + $0x8] sm:$0xff]
        %v433 = vpack.c.bf16 %v432, %v431
        %v434 = vld [vmem:[#allocation2] sm:$0xf]
        %v435 = vld [vmem:[#allocation2 + $0x4] sm:$0xf]
        %v436 = vld [vmem:[#allocation2 + $0x8] sm:$0xf]
        %v437 = vld [vmem:[#allocation2 + $0xc] sm:$0xf]
        %v438 = vld [vmem:[%s2] sm:$0x1]
        %v440 = vlaneseq
        %v441 = vshrl.u32 %v440, 7
        %v442 = vsub.s32 0, %v441
        %v443 = vrot.slane %v438, %v442
        %v449 = vunpack.c.l.b16 %v434
        %v450 = vunpack.c.l.b16 %v435
        %v451 = vunpack.c.l.b16 %v436
        %v452 = vunpack.c.l.b16 %v437
        %v453 = vpack.c.b16 %v450, %v449
        %v454 = vpack.c.b16 %v452, %v451
        %vm457 = vcmask 261120
        %v459 = vsel %vm457, %v433, 0
        %461 = vmatprep.subr.bf16.mxu0 0
        %462 = vmatpush1.bf16.msra.mxu0 %v453
        %463 = vmatprep.subr.bf16.mxu0 0
        %464 = vmatpush1.bf16.msra.mxu0 %v454
        %465 = vmatprep.subr.bf16.mxu0 0
        %466 = vmatpush1.bf16.msra.mxu0 0
        %467 = vmatprep.subr.bf16.mxu0 0
        %468 = vmatpush1.bf16.msra.mxu0 0
        %469 = vmatprep.subr.bf16.mxu0 0
        %470 = vmatpush1.bf16.msra.mxu0 0
        %471 = vmatprep.subr.bf16.mxu0 0
        %472 = vmatpush1.bf16.msra.mxu0 0
        %473 = vmatprep.subr.bf16.mxu0 0
        %474 = vmatpush1.bf16.msra.mxu0 0
        %475 = vmatprep.subr.bf16.mxu0 0
        %476 = vmatpush1.bf16.msra.mxu0 0
        %477 = vmatprep.subr.bf16.mxu0 0
        %478 = vmatpush1.bf16.msra.mxu0 0
        %479 = vmatprep.subr.bf16.mxu0 0
        %480 = vmatpush1.bf16.msra.mxu0 0
        %481 = vmatprep.subr.bf16.mxu0 0
        %482 = vmatpush1.bf16.msra.mxu0 0
        %483 = vmatprep.subr.bf16.mxu0 0
        %484 = vmatpush1.bf16.msra.mxu0 0
        %485 = vmatprep.subr.bf16.mxu0 0
        %486 = vmatpush1.bf16.msra.mxu0 0
        %487 = vmatprep.subr.bf16.mxu0 0
        %488 = vmatpush1.bf16.msra.mxu0 0
        %489 = vmatprep.subr.bf16.mxu0 0
        %490 = vmatpush1.bf16.msra.mxu0 0
        %491 = vmatprep.subr.bf16.mxu0 0
        %492 = vmatpush1.bf16.msra.mxu0 0
        %493 = vmatprep.mubr.bf16.mxu0 0
        %494 = vmatmul.mubr.bf16.gmra.mrb[0].mxu0 %v459
        %v495 = vpop.f32.mrb[0].mxu0
        %v496 = vadd.f32 %v443, %v495
        %v497 = vpop.f32.mrb[0].mxu0
        %v498 = vpop.f32.mrb[0].mxu0
        %v499 = vadd.f32 %v443, %v498
        %v500 = vpop.f32.mrb[0].mxu0
        %501 = vdwg.mxu0
        %v502 = vmax.f32 %v496, 0.0
        %v503 = vmax.f32 %v499, 0.0
        %v504 = vpack.c.bf16 %v503, %v502
        %v505 = vld [vmem:[%s3] sm:$0xf]
        %v506 = vld [vmem:[%s3 + $0x4] sm:$0xf]
        %v507 = vld [vmem:[%s3 + $0x8] sm:$0xf]
        %v508 = vld [vmem:[%s3 + $0xc] sm:$0xf]
        %v509 = vld [vmem:[%s3 + $0x10] sm:$0xf]
        %v510 = vld [vmem:[%s3 + $0x14] sm:$0xf]
        %v511 = vld [vmem:[%s3 + $0x18] sm:$0xf]
        %v512 = vld [vmem:[%s3 + $0x1c] sm:$0xf]
        %v513 = vld [vmem:[%s3 + $0x20] sm:$0xf]
        %v514 = vld [vmem:[%s3 + $0x24] sm:$0xf]
        %v515 = vld [vmem:[%s3 + $0x28] sm:$0xf]
        %v516 = vld [vmem:[%s3 + $0x2c] sm:$0xf]
        %v517 = vld [vmem:[%s3 + $0x30] sm:$0xf]
        %v518 = vld [vmem:[%s3 + $0x34] sm:$0xf]
        %v519 = vld [vmem:[%s3 + $0x38] sm:$0xf]
        %v520 = vld [vmem:[%s3 + $0x3c] sm:$0xf]
        %v521 = vld [vmem:[%s4] sm:$0x1]
        %v523 = vlaneseq
        %v524 = vshrl.u32 %v523, 7
        %v525 = vsub.s32 0, %v524
        %v526 = vrot.slane %v521, %v525
        %v544 = vunpack.c.l.b16 %v505
        %v545 = vunpack.c.l.b16 %v506
        %v546 = vunpack.c.l.b16 %v507
        %v547 = vunpack.c.l.b16 %v508
        %v548 = vunpack.c.l.b16 %v509
        %v549 = vunpack.c.l.b16 %v510
        %v550 = vunpack.c.l.b16 %v511
        %v551 = vunpack.c.l.b16 %v512
        %v552 = vunpack.c.l.b16 %v513
        %v553 = vunpack.c.l.b16 %v514
        %v554 = vunpack.c.l.b16 %v515
        %v555 = vunpack.c.l.b16 %v516
        %v556 = vunpack.c.l.b16 %v517
        %v557 = vunpack.c.l.b16 %v518
        %v558 = vunpack.c.l.b16 %v519
        %v559 = vunpack.c.l.b16 %v520
        %v560 = vpack.c.b16 %v545, %v544
        %v561 = vpack.c.b16 %v547, %v546
        %v562 = vpack.c.b16 %v549, %v548
        %v563 = vpack.c.b16 %v551, %v550
        %v564 = vpack.c.b16 %v553, %v552
        %v565 = vpack.c.b16 %v555, %v554
        %v566 = vpack.c.b16 %v557, %v556
        %v567 = vpack.c.b16 %v559, %v558
        %576 = vmatprep.subr.bf16.mxu0 0
        %577 = vmatpush1.bf16.msra.mxu0 %v560
        %578 = vmatprep.subr.bf16.mxu0 0
        %579 = vmatpush1.bf16.msra.mxu0 %v561
        %580 = vmatprep.subr.bf16.mxu0 0
        %581 = vmatpush1.bf16.msra.mxu0 %v562
        %582 = vmatprep.subr.bf16.mxu0 0
        %583 = vmatpush1.bf16.msra.mxu0 %v563
        %584 = vmatprep.subr.bf16.mxu0 0
        %585 = vmatpush1.bf16.msra.mxu0 %v564
        %586 = vmatprep.subr.bf16.mxu0 0
        %587 = vmatpush1.bf16.msra.mxu0 %v565
        %588 = vmatprep.subr.bf16.mxu0 0
        %589 = vmatpush1.bf16.msra.mxu0 %v566
        %590 = vmatprep.subr.bf16.mxu0 0
        %591 = vmatpush1.bf16.msra.mxu0 %v567
        %592 = vmatprep.subr.bf16.mxu0 0
        %593 = vmatpush1.bf16.msra.mxu0 0
        %594 = vmatprep.subr.bf16.mxu0 0
        %595 = vmatpush1.bf16.msra.mxu0 0
        %596 = vmatprep.subr.bf16.mxu0 0
        %597 = vmatpush1.bf16.msra.mxu0 0
        %598 = vmatprep.subr.bf16.mxu0 0
        %599 = vmatpush1.bf16.msra.mxu0 0
        %600 = vmatprep.subr.bf16.mxu0 0
        %601 = vmatpush1.bf16.msra.mxu0 0
        %602 = vmatprep.subr.bf16.mxu0 0
        %603 = vmatpush1.bf16.msra.mxu0 0
        %604 = vmatprep.subr.bf16.mxu0 0
        %605 = vmatpush1.bf16.msra.mxu0 0
        %606 = vmatprep.subr.bf16.mxu0 0
        %607 = vmatpush1.bf16.msra.mxu0 0
        %608 = vmatprep.mubr.bf16.mxu0 0
        %609 = vmatmul.mubr.bf16.gmra.mrb[0].mxu0 %v504
        %v610 = vpop.f32.mrb[0].mxu0
        %v611 = vadd.f32 %v526, %v610
        %v612 = vpop.f32.mrb[0].mxu0
        %v613 = vpop.f32.mrb[0].mxu0
        %v614 = vadd.f32 %v526, %v613
        %v615 = vpop.f32.mrb[0].mxu0
        %616 = vdwg.mxu0
        %v617 = vmax.f32 %v611, 0.0
        %v618 = vmax.f32 %v614, 0.0
        %v619 = vpack.c.bf16 %v618, %v617
        %v620 = vld [vmem:[%s5] sm:$0xf]
        %v621 = vld [vmem:[%s5 + $0x4] sm:$0xf]
        %v622 = vld [vmem:[%s5 + $0x8] sm:$0xf]
        %v623 = vld [vmem:[%s5 + $0xc] sm:$0xf]
        %v624 = vld [vmem:[%s5 + $0x10] sm:$0xf]
        %v625 = vld [vmem:[%s5 + $0x14] sm:$0xf]
        %v626 = vld [vmem:[%s5 + $0x18] sm:$0xf]
        %v627 = vld [vmem:[%s5 + $0x1c] sm:$0xf]
        %v628 = vld [vmem:[%s5 + $0x20] sm:$0xf]
        %v629 = vld [vmem:[%s5 + $0x24] sm:$0xf]
        %v630 = vld [vmem:[%s5 + $0x28] sm:$0xf]
        %v631 = vld [vmem:[%s5 + $0x2c] sm:$0xf]
        %v632 = vld [vmem:[%s5 + $0x30] sm:$0xf]
        %v633 = vld [vmem:[%s5 + $0x34] sm:$0xf]
        %v634 = vld [vmem:[%s5 + $0x38] sm:$0xf]
        %v635 = vld [vmem:[%s5 + $0x3c] sm:$0xf]
        %v636 = vld [vmem:[%s6] sm:$0x1]
        %v638 = vlaneseq
        %v639 = vshrl.u32 %v638, 7
        %v640 = vsub.s32 0, %v639
        %v641 = vrot.slane %v636, %v640
        %v659 = vunpack.c.l.b16 %v620
        %v660 = vunpack.c.l.b16 %v621
        %v661 = vunpack.c.l.b16 %v622
        %v662 = vunpack.c.l.b16 %v623
        %v663 = vunpack.c.l.b16 %v624
        %v664 = vunpack.c.l.b16 %v625
        %v665 = vunpack.c.l.b16 %v626
        %v666 = vunpack.c.l.b16 %v627
        %v667 = vunpack.c.l.b16 %v628
        %v668 = vunpack.c.l.b16 %v629
        %v669 = vunpack.c.l.b16 %v630
        %v670 = vunpack.c.l.b16 %v631
        %v671 = vunpack.c.l.b16 %v632
        %v672 = vunpack.c.l.b16 %v633
        %v673 = vunpack.c.l.b16 %v634
        %v674 = vunpack.c.l.b16 %v635
        %v675 = vpack.c.b16 %v660, %v659
        %v676 = vpack.c.b16 %v662, %v661
        %v677 = vpack.c.b16 %v664, %v663
        %v678 = vpack.c.b16 %v666, %v665
        %v679 = vpack.c.b16 %v668, %v667
        %v680 = vpack.c.b16 %v670, %v669
        %v681 = vpack.c.b16 %v672, %v671
        %v682 = vpack.c.b16 %v674, %v673
        %691 = vmatprep.subr.bf16.mxu0 0
        %692 = vmatpush1.bf16.msra.mxu0 %v675
        %693 = vmatprep.subr.bf16.mxu0 0
        %694 = vmatpush1.bf16.msra.mxu0 %v676
        %695 = vmatprep.subr.bf16.mxu0 0
        %696 = vmatpush1.bf16.msra.mxu0 %v677
        %697 = vmatprep.subr.bf16.mxu0 0
        %698 = vmatpush1.bf16.msra.mxu0 %v678
        %699 = vmatprep.subr.bf16.mxu0 0
        %700 = vmatpush1.bf16.msra.mxu0 %v679
        %701 = vmatprep.subr.bf16.mxu0 0
        %702 = vmatpush1.bf16.msra.mxu0 %v680
        %703 = vmatprep.subr.bf16.mxu0 0
        %704 = vmatpush1.bf16.msra.mxu0 %v681
        %705 = vmatprep.subr.bf16.mxu0 0
        %706 = vmatpush1.bf16.msra.mxu0 %v682
        %707 = vmatprep.subr.bf16.mxu0 0
        %708 = vmatpush1.bf16.msra.mxu0 0
        %709 = vmatprep.subr.bf16.mxu0 0
        %710 = vmatpush1.bf16.msra.mxu0 0
        %711 = vmatprep.subr.bf16.mxu0 0
        %712 = vmatpush1.bf16.msra.mxu0 0
        %713 = vmatprep.subr.bf16.mxu0 0
        %714 = vmatpush1.bf16.msra.mxu0 0
        %715 = vmatprep.subr.bf16.mxu0 0
        %716 = vmatpush1.bf16.msra.mxu0 0
        %717 = vmatprep.subr.bf16.mxu0 0
        %718 = vmatpush1.bf16.msra.mxu0 0
        %719 = vmatprep.subr.bf16.mxu0 0
        %720 = vmatpush1.bf16.msra.mxu0 0
        %721 = vmatprep.subr.bf16.mxu0 0
        %722 = vmatpush1.bf16.msra.mxu0 0
        %723 = vmatprep.mubr.bf16.mxu0 0
        %724 = vmatmul.mubr.bf16.gmra.mrb[0].mxu0 %v619
        %v725 = vpop.f32.mrb[0].mxu0
        %v726 = vadd.f32 %v641, %v725
        %v727 = vpop.f32.mrb[0].mxu0
        %v728 = vpop.f32.mrb[0].mxu0
        %v729 = vadd.f32 %v641, %v728
        %v730 = vpop.f32.mrb[0].mxu0
        %731 = vdwg.mxu0
        %vm732 = vcmask 130048
        %733 = vst.msk [vmem:[%s377] sm:$0xff] %vm732, %v726
        %734 = vst.msk [vmem:[%s377 + $0x8] sm:$0xff] %vm732, %v729
        %vm735 = vcmask 195712
        %v736 = vsel %vm735, %v726, -inf
        %737 = vmax.xlane.f32.xlu0 %v736
        %v738 = vpop.xlane.xlu0 %737
        %v739 = vsel %vm735, %v729, -inf
        %740 = vmax.xlane.f32.xlu0 %v739
        %v741 = vpop.xlane.xlu0 %740
        %v742 = vsub.f32 %v726, %v738
        %v743 = vsub.f32 %v729, %v741
        %v744 = vmul.f32 %v742, 1.442695
        %v745 = vpow.pop %v744
        %v746 = vmul.f32 %v743, 1.442695
        %v747 = vpow.pop %v746
        %750 = vrot.lane.b32.xlu0 %v745, 112
        %v751 = vpop.permute.xlu0 %750
        %752 = vrot.lane.b32.xlu0 %v747, 112
        %v753 = vpop.permute.xlu0 %752
        %vm756 = vcmask 64512
        %v757 = vsel %vm756, %v751, 0.0
        %758 = vadd.xlane.f32.xlu0 %v757
        %v759 = vpop.xlane.xlu0 %758
        %v760 = vsel %vm756, %v753, 0.0
        %761 = vadd.xlane.f32.xlu0 %v760
        %v762 = vpop.xlane.xlu0 %761
        %v763 = vrcp.pop %v759
        %v764 = vrcp.pop %v762
        %v765 = vmul.f32 %v745, %v763
        %v766 = vmul.f32 %v747, %v764
        %769 = vrot.lane.b32.xlu0 %v765, 112
        %v770 = vpop.permute.xlu0 %769
        %771 = vrot.lane.b32.xlu0 %v766, 112
        %v772 = vpop.permute.xlu0 %771
        %775 = vst.msk [vmem:[%s383] sm:$0xff] %vm756, %v770
        %776 = vst.msk [vmem:[%s383 + $0x8] sm:$0xff] %vm756, %v772
        %vm777 = vcmask 261312
        %v778 = vsel %vm777, %v726, -inf
        %779 = vmax.xlane.f32.xlu0 %v778
        %v780 = vpop.xlane.xlu0 %779
        %v781 = vsel %vm777, %v729, -inf
        %782 = vmax.xlane.f32.xlu0 %v781
        %v783 = vpop.xlane.xlu0 %782
        %v784 = vsub.f32 %v726, %v780
        %v785 = vsub.f32 %v729, %v783
        %v786 = vmul.f32 %v784, 1.442695
        %v787 = vpow.pop %v786
        %v788 = vmul.f32 %v785, 1.442695
        %v789 = vpow.pop %v788
        %792 = vrot.lane.b32.xlu0 %v787, 104
        %v793 = vpop.permute.xlu0 %792
        %794 = vrot.lane.b32.xlu0 %v789, 104
        %v795 = vpop.permute.xlu0 %794
        %v798 = vsel %vm756, %v793, 0.0
        %799 = vadd.xlane.f32.xlu0 %v798
        %v800 = vpop.xlane.xlu0 %799
        %v801 = vsel %vm756, %v795, 0.0
        %802 = vadd.xlane.f32.xlu0 %v801
        %v803 = vpop.xlane.xlu0 %802
        %v804 = vrcp.pop %v800
        %v805 = vrcp.pop %v803
        %v806 = vmul.f32 %v787, %v804
        %v807 = vmul.f32 %v789, %v805
        %810 = vrot.lane.b32.xlu0 %v806, 104
        %v811 = vpop.permute.xlu0 %810
        %812 = vrot.lane.b32.xlu0 %v807, 104
        %v813 = vpop.permute.xlu0 %812
        %816 = vst.msk [vmem:[%s389] sm:$0xff] %vm756, %v811
        %817 = vst.msk [vmem:[%s389 + $0x8] sm:$0xff] %vm756, %v813
        %vm818 = vcmask 326912
        %v819 = vsel %vm818, %v726, -inf
        %820 = vmax.xlane.f32.xlu0 %v819
        %v821 = vpop.xlane.xlu0 %820
        %v822 = vsel %vm818, %v729, -inf
        %823 = vmax.xlane.f32.xlu0 %v822
        %v824 = vpop.xlane.xlu0 %823
        %v825 = vsub.f32 %v726, %v821
        %v826 = vsub.f32 %v729, %v824
        %v827 = vmul.f32 %v825, 1.442695
        %v828 = vpow.pop %v827
        %v829 = vmul.f32 %v826, 1.442695
        %v830 = vpow.pop %v829
        %833 = vrot.lane.b32.xlu0 %v828, 96
        %v834 = vpop.permute.xlu0 %833
        %835 = vrot.lane.b32.xlu0 %v830, 96
        %v836 = vpop.permute.xlu0 %835
        %v839 = vsel %vm756, %v834, 0.0
        %840 = vadd.xlane.f32.xlu0 %v839
        %v841 = vpop.xlane.xlu0 %840
        %v842 = vsel %vm756, %v836, 0.0
        %843 = vadd.xlane.f32.xlu0 %v842
        %v844 = vpop.xlane.xlu0 %843
        %v845 = vrcp.pop %v841
        %v846 = vrcp.pop %v844
        %v847 = vmul.f32 %v828, %v845
        %v848 = vmul.f32 %v830, %v846
        %851 = vrot.lane.b32.xlu0 %v847, 96
        %v852 = vpop.permute.xlu0 %851
        %853 = vrot.lane.b32.xlu0 %v848, 96
        %v854 = vpop.permute.xlu0 %853
        %857 = vst.msk [vmem:[%s395] sm:$0xff] %vm756, %v852
        %858 = vst.msk [vmem:[%s395 + $0x8] sm:$0xff] %vm756, %v854
        %s859 = sand.u32 %s183, 1
        %s860 = sand.u32 %s183, 1
        %s861 = smul.addr %s860, 16
        %s862 = scalar_lea.vmem [#allocation4], %s861
        %s863 = sand.u32 %s209, 1
        %s864 = sand.u32 %s209, 1
        %s865 = smul.addr %s864, 16
        %s866 = scalar_lea.vmem [#allocation5], %s865
        %s867 = sand.u32 %s235, 1
        %s868 = sand.u32 %s235, 1
        %s869 = smul.addr %s868, 16
        %s870 = scalar_lea.vmem [#allocation6], %s869
        %s871 = sand.u32 %s261, 1
        %s872 = sand.u32 %s261, 1
        %s873 = smul.addr %s872, 16
        %s874 = scalar_lea.vmem [#allocation7], %s873
        // Predicated region
        $region53: #{decoder_forward.1} parent=47 // pred_check
          %p875 = pneg %p193
        $region54: #{decoder_forward.1} parent=47 // pred_check_branch
          %877 = sbr.rel (%p875) target = $region56
        $region55: #{decoder_forward.1} parent=47 // pred_region
          %s878 = smul.u32 2, %s23
          %s879 = ssub.s32 3, %s878
          %p880 = scmp.lt.s32.totalorder %s879, 2
          %s881 = scalar_select %p880, %s879, 2
          %s882 = smul.u32 128, %s881
          %p883 = scmp.ne.s32.totalorder 0, %s882
          %s884 = smul.addr %s878, 8
          %s885 = scalar_lea.vmem %s7, %s884
          // Predicated region
          $region57: #{decoder_forward.1} parent=55 // pred_check
            %p886 = pneg %p883
          $region58: #{decoder_forward.1} parent=55 // pred_check_branch
            %888 = sbr.rel (%p886) target = $region60
          $region59: #{decoder_forward.1} parent=55 // pred_region
            // Predicated region
            $region61: #{decoder_forward.1} parent=59 // pred_check
              _
            $region62: #{decoder_forward.1} parent=59 // pred_check_branch
              %890 = sbr.rel (0) target = $region64
            $region63: #{decoder_forward.1} parent=59 // pred_region
              // Predicated region
              $region83: #{decoder_forward.1} parent=63 // pred_check
                _
              $region84: #{decoder_forward.1} parent=63 // pred_check_branch
                %941 = sbr.rel (0) target = $region86
              $region85: #{decoder_forward.1} parent=63 // pred_region
                %s942 = sshrl.u32 %s881, 1
                // While loop
                $region87: #{decoder_forward.1} parent=85 // loop_pre_header
                  _
                $region88: #{decoder_forward.1} parent=85 // loop_header
                  %s944 = sphi 0, %s946
                  %p945 = scmp.ge.s32.totalorder %s944, %s942
                  %s949 = sphi 0, %s958
                  %s950 = sphi %s862, %s961
                  %s951 = sphi %s885, %s962
                $region89: #{decoder_forward.1} parent=85 // loop_header_branch
                  %948 = sbr.rel (%p945) target = $region93
                $region90: #{decoder_forward.1} parent=85 // loop_body
                  %v952 = vld [vmem:[%s950] sm:$0xff]
                  %953 = vst [vmem:[%s951] sm:$0xff] %v952
                  %v954 = vld [vmem:[%s950 + $0x8] sm:$0xff]
                  %955 = vst [vmem:[%s951 + $0x8] sm:$0xff] %v954
                  %s956 = sadd.s32 1, %s949
                  %p957 = scmp.ge.s32.totalorder %s956, %s942
                  %s958 = scalar_select %p957, 0, %s956
                  %s959 = smul.u32 %s958, 16
                  %s960 = smul.u32 %s958, 16
                  %s961 = scalar_lea.vmem %s862, %s959 [#allocation4]
                  %s962 = scalar_lea.vmem %s885, %s960
                $region91: #{decoder_forward.1} parent=85 // loop_footer
                  %s946 = sadd.s32 %s944, 1
                $region92: #{decoder_forward.1} parent=85 // loop_footer_branch
                  %943 = sbr.rel target = $region88
                $region93: #{decoder_forward.1} parent=85 // loop_exit
                  _
                %s963 = sshrl.u32 %s881, 1
                %s964 = sand.u32 %s881, 1
                %s965 = smul.u32 %s963, 2
                %s966 = smul.u32 8, %s965
                %s967 = scalar_lea.vmem %s862, %s966 [#allocation4]
                %s968 = smul.u32 8, %s965
                %s969 = scalar_lea.vmem %s885, %s968
                // While loop
                $region94: #{decoder_forward.1} parent=85 // loop_pre_header
                  _
                $region95: #{decoder_forward.1} parent=85 // loop_header
                  %s971 = sphi 0, %s973
                  %p972 = scmp.ge.s32.totalorder %s971, %s964
                  %s976 = sphi 0, %s983
                  %s977 = sphi %s967, %s986
                  %s978 = sphi %s969, %s987
                $region96: #{decoder_forward.1} parent=85 // loop_header_branch
                  %975 = sbr.rel (%p972) target = $region100
                $region97: #{decoder_forward.1} parent=85 // loop_body
                  %v979 = vld [vmem:[%s977] sm:$0xff]
                  %980 = vst [vmem:[%s978] sm:$0xff] %v979
                  %s981 = sadd.s32 1, %s976
                  %p982 = scmp.ge.s32.totalorder %s981, %s964
                  %s983 = scalar_select %p982, 0, %s981
                  %s984 = smul.u32 %s983, 8
                  %s985 = smul.u32 %s983, 8
                  %s986 = scalar_lea.vmem %s967, %s984 [#allocation4]
                  %s987 = scalar_lea.vmem %s969, %s985
                $region98: #{decoder_forward.1} parent=85 // loop_footer
                  %s973 = sadd.s32 %s971, 1
                $region99: #{decoder_forward.1} parent=85 // loop_footer_branch
                  %970 = sbr.rel target = $region95
                $region100: #{decoder_forward.1} parent=85 // loop_exit
                  _
              $region86: #{decoder_forward.1} parent=63 // pred_fallthru
                _
              // Predicated region
              $region101: #{decoder_forward.1} parent=63 // pred_check
                _
              $region102: #{decoder_forward.1} parent=63 // pred_check_branch
                %989 = sbr.rel target = $region104
              $region103: #{decoder_forward.1} parent=63 // pred_region
                _
              $region104: #{decoder_forward.1} parent=63 // pred_fallthru
                _
            $region64: #{decoder_forward.1} parent=59 // pred_fallthru
              _
            // Predicated region
            $region65: #{decoder_forward.1} parent=59 // pred_check
              _
            $region66: #{decoder_forward.1} parent=59 // pred_check_branch
              %892 = sbr.rel target = $region68
            $region67: #{decoder_forward.1} parent=59 // pred_region
              %s894 = sshrl.u32 %s881, 1
              // While loop
              $region69: #{decoder_forward.1} parent=67 // loop_pre_header
                _
              $region70: #{decoder_forward.1} parent=67 // loop_header
                %s896 = sphi 0, %s898
                %p897 = scmp.ge.s32.totalorder %s896, %s894
                %s901 = sphi 0, %s910
                %s902 = sphi %s862, %s913
                %s903 = sphi %s885, %s914
              $region71: #{decoder_forward.1} parent=67 // loop_header_branch
                %900 = sbr.rel (%p897) target = $region75
              $region72: #{decoder_forward.1} parent=67 // loop_body
                %v904 = vld [vmem:[%s902] sm:$0xff]
                %905 = vst [vmem:[%s903] sm:$0xff] %v904
                %v906 = vld [vmem:[%s902 + $0x8] sm:$0xff]
                %907 = vst [vmem:[%s903 + $0x8] sm:$0xff] %v906
                %s908 = sadd.s32 1, %s901
                %p909 = scmp.ge.s32.totalorder %s908, %s894
                %s910 = scalar_select %p909, 0, %s908
                %s911 = smul.u32 %s910, 16
                %s912 = smul.u32 %s910, 16
                %s913 = scalar_lea.vmem %s862, %s911 [#allocation4]
                %s914 = scalar_lea.vmem %s885, %s912
              $region73: #{decoder_forward.1} parent=67 // loop_footer
                %s898 = sadd.s32 %s896, 1
              $region74: #{decoder_forward.1} parent=67 // loop_footer_branch
                %895 = sbr.rel target = $region70
              $region75: #{decoder_forward.1} parent=67 // loop_exit
                _
              %s915 = sshrl.u32 %s881, 1
              %s916 = sand.u32 %s881, 1
              %s917 = smul.u32 %s915, 2
              %s918 = smul.u32 8, %s917
              %s919 = scalar_lea.vmem %s862, %s918 [#allocation4]
              %s920 = smul.u32 8, %s917
              %s921 = scalar_lea.vmem %s885, %s920
              // While loop
              $region76: #{decoder_forward.1} parent=67 // loop_pre_header
                _
              $region77: #{decoder_forward.1} parent=67 // loop_header
                %s923 = sphi 0, %s925
                %p924 = scmp.ge.s32.totalorder %s923, %s916
                %s928 = sphi 0, %s935
                %s929 = sphi %s919, %s938
                %s930 = sphi %s921, %s939
              $region78: #{decoder_forward.1} parent=67 // loop_header_branch
                %927 = sbr.rel (%p924) target = $region82
              $region79: #{decoder_forward.1} parent=67 // loop_body
                %v931 = vld [vmem:[%s929] sm:$0xff]
                %932 = vst [vmem:[%s930] sm:$0xff] %v931
                %s933 = sadd.s32 1, %s928
                %p934 = scmp.ge.s32.totalorder %s933, %s916
                %s935 = scalar_select %p934, 0, %s933
                %s936 = smul.u32 %s935, 8
                %s937 = smul.u32 %s935, 8
                %s938 = scalar_lea.vmem %s919, %s936 [#allocation4]
                %s939 = scalar_lea.vmem %s921, %s937
              $region80: #{decoder_forward.1} parent=67 // loop_footer
                %s925 = sadd.s32 %s923, 1
              $region81: #{decoder_forward.1} parent=67 // loop_footer_branch
                %922 = sbr.rel target = $region77
              $region82: #{decoder_forward.1} parent=67 // loop_exit
                _
            $region68: #{decoder_forward.1} parent=59 // pred_fallthru
              _
          $region60: #{decoder_forward.1} parent=55 // pred_fallthru
            _
          %990 = vnop
        $region56: #{decoder_forward.1} parent=47 // pred_fallthru
          _
        // Predicated region
        $region105: #{decoder_forward.1} parent=47 // pred_check
          %p991 = pneg %p219
        $region106: #{decoder_forward.1} parent=47 // pred_check_branch
          %993 = sbr.rel (%p991) target = $region108
        $region107: #{decoder_forward.1} parent=47 // pred_region
          %s994 = smul.u32 2, %s23
          %s995 = ssub.s32 3, %s994
          %p996 = scmp.lt.s32.totalorder %s995, 2
          %s997 = scalar_select %p996, %s995, 2
          %s998 = smul.u32 128, %s997
          %p999 = scmp.ne.s32.totalorder 0, %s998
          %s1000 = smul.addr %s994, 8
          %s1001 = scalar_lea.vmem %s8, %s1000
          // Predicated region
          $region109: #{decoder_forward.1} parent=107 // pred_check
            %p1002 = pneg %p999
          $region110: #{decoder_forward.1} parent=107 // pred_check_branch
            %1004 = sbr.rel (%p1002) target = $region112
          $region111: #{decoder_forward.1} parent=107 // pred_region
            // Predicated region
            $region113: #{decoder_forward.1} parent=111 // pred_check
              _
            $region114: #{decoder_forward.1} parent=111 // pred_check_branch
              %1006 = sbr.rel (0) target = $region116
            $region115: #{decoder_forward.1} parent=111 // pred_region
              // Predicated region
              $region135: #{decoder_forward.1} parent=115 // pred_check
                _
              $region136: #{decoder_forward.1} parent=115 // pred_check_branch
                %1057 = sbr.rel (0) target = $region138
              $region137: #{decoder_forward.1} parent=115 // pred_region
                %s1058 = sshrl.u32 %s997, 1
                // While loop
                $region139: #{decoder_forward.1} parent=137 // loop_pre_header
                  _
                $region140: #{decoder_forward.1} parent=137 // loop_header
                  %s1060 = sphi 0, %s1062
                  %p1061 = scmp.ge.s32.totalorder %s1060, %s1058
                  %s1065 = sphi 0, %s1074
                  %s1066 = sphi %s866, %s1077
                  %s1067 = sphi %s1001, %s1078
                $region141: #{decoder_forward.1} parent=137 // loop_header_branch
                  %1064 = sbr.rel (%p1061) target = $region145
                $region142: #{decoder_forward.1} parent=137 // loop_body
                  %v1068 = vld [vmem:[%s1066] sm:$0xff]
                  %1069 = vst [vmem:[%s1067] sm:$0xff] %v1068
                  %v1070 = vld [vmem:[%s1066 + $0x8] sm:$0xff]
                  %1071 = vst [vmem:[%s1067 + $0x8] sm:$0xff] %v1070
                  %s1072 = sadd.s32 1, %s1065
                  %p1073 = scmp.ge.s32.totalorder %s1072, %s1058
                  %s1074 = scalar_select %p1073, 0, %s1072
                  %s1075 = smul.u32 %s1074, 16
                  %s1076 = smul.u32 %s1074, 16
                  %s1077 = scalar_lea.vmem %s866, %s1075 [#allocation5]
                  %s1078 = scalar_lea.vmem %s1001, %s1076
                $region143: #{decoder_forward.1} parent=137 // loop_footer
                  %s1062 = sadd.s32 %s1060, 1
                $region144: #{decoder_forward.1} parent=137 // loop_footer_branch
                  %1059 = sbr.rel target = $region140
                $region145: #{decoder_forward.1} parent=137 // loop_exit
                  _
                %s1079 = sshrl.u32 %s997, 1
                %s1080 = sand.u32 %s997, 1
                %s1081 = smul.u32 %s1079, 2
                %s1082 = smul.u32 8, %s1081
                %s1083 = scalar_lea.vmem %s866, %s1082 [#allocation5]
                %s1084 = smul.u32 8, %s1081
                %s1085 = scalar_lea.vmem %s1001, %s1084
                // While loop
                $region146: #{decoder_forward.1} parent=137 // loop_pre_header
                  _
                $region147: #{decoder_forward.1} parent=137 // loop_header
                  %s1087 = sphi 0, %s1089
                  %p1088 = scmp.ge.s32.totalorder %s1087, %s1080
                  %s1092 = sphi 0, %s1099
                  %s1093 = sphi %s1083, %s1102
                  %s1094 = sphi %s1085, %s1103
                $region148: #{decoder_forward.1} parent=137 // loop_header_branch
                  %1091 = sbr.rel (%p1088) target = $region152
                $region149: #{decoder_forward.1} parent=137 // loop_body
                  %v1095 = vld [vmem:[%s1093] sm:$0xff]
                  %1096 = vst [vmem:[%s1094] sm:$0xff] %v1095
                  %s1097 = sadd.s32 1, %s1092
                  %p1098 = scmp.ge.s32.totalorder %s1097, %s1080
                  %s1099 = scalar_select %p1098, 0, %s1097
                  %s1100 = smul.u32 %s1099, 8
                  %s1101 = smul.u32 %s1099, 8
                  %s1102 = scalar_lea.vmem %s1083, %s1100 [#allocation5]
                  %s1103 = scalar_lea.vmem %s1085, %s1101
                $region150: #{decoder_forward.1} parent=137 // loop_footer
                  %s1089 = sadd.s32 %s1087, 1
                $region151: #{decoder_forward.1} parent=137 // loop_footer_branch
                  %1086 = sbr.rel target = $region147
                $region152: #{decoder_forward.1} parent=137 // loop_exit
                  _
              $region138: #{decoder_forward.1} parent=115 // pred_fallthru
                _
              // Predicated region
              $region153: #{decoder_forward.1} parent=115 // pred_check
                _
              $region154: #{decoder_forward.1} parent=115 // pred_check_branch
                %1105 = sbr.rel target = $region156
              $region155: #{decoder_forward.1} parent=115 // pred_region
                _
              $region156: #{decoder_forward.1} parent=115 // pred_fallthru
                _
            $region116: #{decoder_forward.1} parent=111 // pred_fallthru
              _
            // Predicated region
            $region117: #{decoder_forward.1} parent=111 // pred_check
              _
            $region118: #{decoder_forward.1} parent=111 // pred_check_branch
              %1008 = sbr.rel target = $region120
            $region119: #{decoder_forward.1} parent=111 // pred_region
              %s1010 = sshrl.u32 %s997, 1
              // While loop
              $region121: #{decoder_forward.1} parent=119 // loop_pre_header
                _
              $region122: #{decoder_forward.1} parent=119 // loop_header
                %s1012 = sphi 0, %s1014
                %p1013 = scmp.ge.s32.totalorder %s1012, %s1010
                %s1017 = sphi 0, %s1026
                %s1018 = sphi %s866, %s1029
                %s1019 = sphi %s1001, %s1030
              $region123: #{decoder_forward.1} parent=119 // loop_header_branch
                %1016 = sbr.rel (%p1013) target = $region127
              $region124: #{decoder_forward.1} parent=119 // loop_body
                %v1020 = vld [vmem:[%s1018] sm:$0xff]
                %1021 = vst [vmem:[%s1019] sm:$0xff] %v1020
                %v1022 = vld [vmem:[%s1018 + $0x8] sm:$0xff]
                %1023 = vst [vmem:[%s1019 + $0x8] sm:$0xff] %v1022
                %s1024 = sadd.s32 1, %s1017
                %p1025 = scmp.ge.s32.totalorder %s1024, %s1010
                %s1026 = scalar_select %p1025, 0, %s1024
                %s1027 = smul.u32 %s1026, 16
                %s1028 = smul.u32 %s1026, 16
                %s1029 = scalar_lea.vmem %s866, %s1027 [#allocation5]
                %s1030 = scalar_lea.vmem %s1001, %s1028
              $region125: #{decoder_forward.1} parent=119 // loop_footer
                %s1014 = sadd.s32 %s1012, 1
              $region126: #{decoder_forward.1} parent=119 // loop_footer_branch
                %1011 = sbr.rel target = $region122
              $region127: #{decoder_forward.1} parent=119 // loop_exit
                _
              %s1031 = sshrl.u32 %s997, 1
              %s1032 = sand.u32 %s997, 1
              %s1033 = smul.u32 %s1031, 2
              %s1034 = smul.u32 8, %s1033
              %s1035 = scalar_lea.vmem %s866, %s1034 [#allocation5]
              %s1036 = smul.u32 8, %s1033
              %s1037 = scalar_lea.vmem %s1001, %s1036
              // While loop
              $region128: #{decoder_forward.1} parent=119 // loop_pre_header
                _
              $region129: #{decoder_forward.1} parent=119 // loop_header
                %s1039 = sphi 0, %s1041
                %p1040 = scmp.ge.s32.totalorder %s1039, %s1032
                %s1044 = sphi 0, %s1051
                %s1045 = sphi %s1035, %s1054
                %s1046 = sphi %s1037, %s1055
              $region130: #{decoder_forward.1} parent=119 // loop_header_branch
                %1043 = sbr.rel (%p1040) target = $region134
              $region131: #{decoder_forward.1} parent=119 // loop_body
                %v1047 = vld [vmem:[%s1045] sm:$0xff]
                %1048 = vst [vmem:[%s1046] sm:$0xff] %v1047
                %s1049 = sadd.s32 1, %s1044
                %p1050 = scmp.ge.s32.totalorder %s1049, %s1032
                %s1051 = scalar_select %p1050, 0, %s1049
                %s1052 = smul.u32 %s1051, 8
                %s1053 = smul.u32 %s1051, 8
                %s1054 = scalar_lea.vmem %s1035, %s1052 [#allocation5]
                %s1055 = scalar_lea.vmem %s1037, %s1053
              $region132: #{decoder_forward.1} parent=119 // loop_footer
                %s1041 = sadd.s32 %s1039, 1
              $region133: #{decoder_forward.1} parent=119 // loop_footer_branch
                %1038 = sbr.rel target = $region129
              $region134: #{decoder_forward.1} parent=119 // loop_exit
                _
            $region120: #{decoder_forward.1} parent=111 // pred_fallthru
              _
          $region112: #{decoder_forward.1} parent=107 // pred_fallthru
            _
          %1106 = vnop
        $region108: #{decoder_forward.1} parent=47 // pred_fallthru
          _
        // Predicated region
        $region157: #{decoder_forward.1} parent=47 // pred_check
          %p1107 = pneg %p245
        $region158: #{decoder_forward.1} parent=47 // pred_check_branch
          %1109 = sbr.rel (%p1107) target = $region160
        $region159: #{decoder_forward.1} parent=47 // pred_region
          %s1110 = smul.u32 2, %s23
          %s1111 = ssub.s32 3, %s1110
          %p1112 = scmp.lt.s32.totalorder %s1111, 2
          %s1113 = scalar_select %p1112, %s1111, 2
          %s1114 = smul.u32 128, %s1113
          %p1115 = scmp.ne.s32.totalorder 0, %s1114
          %s1116 = smul.addr %s1110, 8
          %s1117 = scalar_lea.vmem %s9, %s1116
          // Predicated region
          $region161: #{decoder_forward.1} parent=159 // pred_check
            %p1118 = pneg %p1115
          $region162: #{decoder_forward.1} parent=159 // pred_check_branch
            %1120 = sbr.rel (%p1118) target = $region164
          $region163: #{decoder_forward.1} parent=159 // pred_region
            // Predicated region
            $region165: #{decoder_forward.1} parent=163 // pred_check
              _
            $region166: #{decoder_forward.1} parent=163 // pred_check_branch
              %1122 = sbr.rel (0) target = $region168
            $region167: #{decoder_forward.1} parent=163 // pred_region
              // Predicated region
              $region187: #{decoder_forward.1} parent=167 // pred_check
                _
              $region188: #{decoder_forward.1} parent=167 // pred_check_branch
                %1173 = sbr.rel (0) target = $region190
              $region189: #{decoder_forward.1} parent=167 // pred_region
                %s1174 = sshrl.u32 %s1113, 1
                // While loop
                $region191: #{decoder_forward.1} parent=189 // loop_pre_header
                  _
                $region192: #{decoder_forward.1} parent=189 // loop_header
                  %s1176 = sphi 0, %s1178
                  %p1177 = scmp.ge.s32.totalorder %s1176, %s1174
                  %s1181 = sphi 0, %s1190
                  %s1182 = sphi %s870, %s1193
                  %s1183 = sphi %s1117, %s1194
                $region193: #{decoder_forward.1} parent=189 // loop_header_branch
                  %1180 = sbr.rel (%p1177) target = $region197
                $region194: #{decoder_forward.1} parent=189 // loop_body
                  %v1184 = vld [vmem:[%s1182] sm:$0xff]
                  %1185 = vst [vmem:[%s1183] sm:$0xff] %v1184
                  %v1186 = vld [vmem:[%s1182 + $0x8] sm:$0xff]
                  %1187 = vst [vmem:[%s1183 + $0x8] sm:$0xff] %v1186
                  %s1188 = sadd.s32 1, %s1181
                  %p1189 = scmp.ge.s32.totalorder %s1188, %s1174
                  %s1190 = scalar_select %p1189, 0, %s1188
                  %s1191 = smul.u32 %s1190, 16
                  %s1192 = smul.u32 %s1190, 16
                  %s1193 = scalar_lea.vmem %s870, %s1191 [#allocation6]
                  %s1194 = scalar_lea.vmem %s1117, %s1192
                $region195: #{decoder_forward.1} parent=189 // loop_footer
                  %s1178 = sadd.s32 %s1176, 1
                $region196: #{decoder_forward.1} parent=189 // loop_footer_branch
                  %1175 = sbr.rel target = $region192
                $region197: #{decoder_forward.1} parent=189 // loop_exit
                  _
                %s1195 = sshrl.u32 %s1113, 1
                %s1196 = sand.u32 %s1113, 1
                %s1197 = smul.u32 %s1195, 2
                %s1198 = smul.u32 8, %s1197
                %s1199 = scalar_lea.vmem %s870, %s1198 [#allocation6]
                %s1200 = smul.u32 8, %s1197
                %s1201 = scalar_lea.vmem %s1117, %s1200
                // While loop
                $region198: #{decoder_forward.1} parent=189 // loop_pre_header
                  _
                $region199: #{decoder_forward.1} parent=189 // loop_header
                  %s1203 = sphi 0, %s1205
                  %p1204 = scmp.ge.s32.totalorder %s1203, %s1196
                  %s1208 = sphi 0, %s1215
                  %s1209 = sphi %s1199, %s1218
                  %s1210 = sphi %s1201, %s1219
                $region200: #{decoder_forward.1} parent=189 // loop_header_branch
                  %1207 = sbr.rel (%p1204) target = $region204
                $region201: #{decoder_forward.1} parent=189 // loop_body
                  %v1211 = vld [vmem:[%s1209] sm:$0xff]
                  %1212 = vst [vmem:[%s1210] sm:$0xff] %v1211
                  %s1213 = sadd.s32 1, %s1208
                  %p1214 = scmp.ge.s32.totalorder %s1213, %s1196
                  %s1215 = scalar_select %p1214, 0, %s1213
                  %s1216 = smul.u32 %s1215, 8
                  %s1217 = smul.u32 %s1215, 8
                  %s1218 = scalar_lea.vmem %s1199, %s1216 [#allocation6]
                  %s1219 = scalar_lea.vmem %s1201, %s1217
                $region202: #{decoder_forward.1} parent=189 // loop_footer
                  %s1205 = sadd.s32 %s1203, 1
                $region203: #{decoder_forward.1} parent=189 // loop_footer_branch
                  %1202 = sbr.rel target = $region199
                $region204: #{decoder_forward.1} parent=189 // loop_exit
                  _
              $region190: #{decoder_forward.1} parent=167 // pred_fallthru
                _
              // Predicated region
              $region205: #{decoder_forward.1} parent=167 // pred_check
                _
              $region206: #{decoder_forward.1} parent=167 // pred_check_branch
                %1221 = sbr.rel target = $region208
              $region207: #{decoder_forward.1} parent=167 // pred_region
                _
              $region208: #{decoder_forward.1} parent=167 // pred_fallthru
                _
            $region168: #{decoder_forward.1} parent=163 // pred_fallthru
              _
            // Predicated region
            $region169: #{decoder_forward.1} parent=163 // pred_check
              _
            $region170: #{decoder_forward.1} parent=163 // pred_check_branch
              %1124 = sbr.rel target = $region172
            $region171: #{decoder_forward.1} parent=163 // pred_region
              %s1126 = sshrl.u32 %s1113, 1
              // While loop
              $region173: #{decoder_forward.1} parent=171 // loop_pre_header
                _
              $region174: #{decoder_forward.1} parent=171 // loop_header
                %s1128 = sphi 0, %s1130
                %p1129 = scmp.ge.s32.totalorder %s1128, %s1126
                %s1133 = sphi 0, %s1142
                %s1134 = sphi %s870, %s1145
                %s1135 = sphi %s1117, %s1146
              $region175: #{decoder_forward.1} parent=171 // loop_header_branch
                %1132 = sbr.rel (%p1129) target = $region179
              $region176: #{decoder_forward.1} parent=171 // loop_body
                %v1136 = vld [vmem:[%s1134] sm:$0xff]
                %1137 = vst [vmem:[%s1135] sm:$0xff] %v1136
                %v1138 = vld [vmem:[%s1134 + $0x8] sm:$0xff]
                %1139 = vst [vmem:[%s1135 + $0x8] sm:$0xff] %v1138
                %s1140 = sadd.s32 1, %s1133
                %p1141 = scmp.ge.s32.totalorder %s1140, %s1126
                %s1142 = scalar_select %p1141, 0, %s1140
                %s1143 = smul.u32 %s1142, 16
                %s1144 = smul.u32 %s1142, 16
                %s1145 = scalar_lea.vmem %s870, %s1143 [#allocation6]
                %s1146 = scalar_lea.vmem %s1117, %s1144
              $region177: #{decoder_forward.1} parent=171 // loop_footer
                %s1130 = sadd.s32 %s1128, 1
              $region178: #{decoder_forward.1} parent=171 // loop_footer_branch
                %1127 = sbr.rel target = $region174
              $region179: #{decoder_forward.1} parent=171 // loop_exit
                _
              %s1147 = sshrl.u32 %s1113, 1
              %s1148 = sand.u32 %s1113, 1
              %s1149 = smul.u32 %s1147, 2
              %s1150 = smul.u32 8, %s1149
              %s1151 = scalar_lea.vmem %s870, %s1150 [#allocation6]
              %s1152 = smul.u32 8, %s1149
              %s1153 = scalar_lea.vmem %s1117, %s1152
              // While loop
              $region180: #{decoder_forward.1} parent=171 // loop_pre_header
                _
              $region181: #{decoder_forward.1} parent=171 // loop_header
                %s1155 = sphi 0, %s1157
                %p1156 = scmp.ge.s32.totalorder %s1155, %s1148
                %s1160 = sphi 0, %s1167
                %s1161 = sphi %s1151, %s1170
                %s1162 = sphi %s1153, %s1171
              $region182: #{decoder_forward.1} parent=171 // loop_header_branch
                %1159 = sbr.rel (%p1156) target = $region186
              $region183: #{decoder_forward.1} parent=171 // loop_body
                %v1163 = vld [vmem:[%s1161] sm:$0xff]
                %1164 = vst [vmem:[%s1162] sm:$0xff] %v1163
                %s1165 = sadd.s32 1, %s1160
                %p1166 = scmp.ge.s32.totalorder %s1165, %s1148
                %s1167 = scalar_select %p1166, 0, %s1165
                %s1168 = smul.u32 %s1167, 8
                %s1169 = smul.u32 %s1167, 8
                %s1170 = scalar_lea.vmem %s1151, %s1168 [#allocation6]
                %s1171 = scalar_lea.vmem %s1153, %s1169
              $region184: #{decoder_forward.1} parent=171 // loop_footer
                %s1157 = sadd.s32 %s1155, 1
              $region185: #{decoder_forward.1} parent=171 // loop_footer_branch
                %1154 = sbr.rel target = $region181
              $region186: #{decoder_forward.1} parent=171 // loop_exit
                _
            $region172: #{decoder_forward.1} parent=163 // pred_fallthru
              _
          $region164: #{decoder_forward.1} parent=159 // pred_fallthru
            _
          %1222 = vnop
        $region160: #{decoder_forward.1} parent=47 // pred_fallthru
          _
        // Predicated region
        $region209: #{decoder_forward.1} parent=47 // pred_check
          %p1223 = pneg %p271
        $region210: #{decoder_forward.1} parent=47 // pred_check_branch
          %1225 = sbr.rel (%p1223) target = $region212
        $region211: #{decoder_forward.1} parent=47 // pred_region
          %s1226 = smul.u32 2, %s23
          %s1227 = ssub.s32 3, %s1226
          %p1228 = scmp.lt.s32.totalorder %s1227, 2
          %s1229 = scalar_select %p1228, %s1227, 2
          %s1230 = smul.u32 128, %s1229
          %p1231 = scmp.ne.s32.totalorder 0, %s1230
          %s1232 = smul.addr %s1226, 8
          %s1233 = scalar_lea.vmem %s10, %s1232
          // Predicated region
          $region213: #{decoder_forward.1} parent=211 // pred_check
            %p1234 = pneg %p1231
          $region214: #{decoder_forward.1} parent=211 // pred_check_branch
            %1236 = sbr.rel (%p1234) target = $region216
          $region215: #{decoder_forward.1} parent=211 // pred_region
            // Predicated region
            $region217: #{decoder_forward.1} parent=215 // pred_check
              _
            $region218: #{decoder_forward.1} parent=215 // pred_check_branch
              %1238 = sbr.rel (0) target = $region220
            $region219: #{decoder_forward.1} parent=215 // pred_region
              // Predicated region
              $region239: #{decoder_forward.1} parent=219 // pred_check
                _
              $region240: #{decoder_forward.1} parent=219 // pred_check_branch
                %1289 = sbr.rel (0) target = $region242
              $region241: #{decoder_forward.1} parent=219 // pred_region
                %s1290 = sshrl.u32 %s1229, 1
                // While loop
                $region243: #{decoder_forward.1} parent=241 // loop_pre_header
                  _
                $region244: #{decoder_forward.1} parent=241 // loop_header
                  %s1292 = sphi 0, %s1294
                  %p1293 = scmp.ge.s32.totalorder %s1292, %s1290
                  %s1297 = sphi 0, %s1306
                  %s1298 = sphi %s874, %s1309
                  %s1299 = sphi %s1233, %s1310
                $region245: #{decoder_forward.1} parent=241 // loop_header_branch
                  %1296 = sbr.rel (%p1293) target = $region249
                $region246: #{decoder_forward.1} parent=241 // loop_body
                  %v1300 = vld [vmem:[%s1298] sm:$0xff]
                  %1301 = vst [vmem:[%s1299] sm:$0xff] %v1300
                  %v1302 = vld [vmem:[%s1298 + $0x8] sm:$0xff]
                  %1303 = vst [vmem:[%s1299 + $0x8] sm:$0xff] %v1302
                  %s1304 = sadd.s32 1, %s1297
                  %p1305 = scmp.ge.s32.totalorder %s1304, %s1290
                  %s1306 = scalar_select %p1305, 0, %s1304
                  %s1307 = smul.u32 %s1306, 16
                  %s1308 = smul.u32 %s1306, 16
                  %s1309 = scalar_lea.vmem %s874, %s1307 [#allocation7]
                  %s1310 = scalar_lea.vmem %s1233, %s1308
                $region247: #{decoder_forward.1} parent=241 // loop_footer
                  %s1294 = sadd.s32 %s1292, 1
                $region248: #{decoder_forward.1} parent=241 // loop_footer_branch
                  %1291 = sbr.rel target = $region244
                $region249: #{decoder_forward.1} parent=241 // loop_exit
                  _
                %s1311 = sshrl.u32 %s1229, 1
                %s1312 = sand.u32 %s1229, 1
                %s1313 = smul.u32 %s1311, 2
                %s1314 = smul.u32 8, %s1313
                %s1315 = scalar_lea.vmem %s874, %s1314 [#allocation7]
                %s1316 = smul.u32 8, %s1313
                %s1317 = scalar_lea.vmem %s1233, %s1316
                // While loop
                $region250: #{decoder_forward.1} parent=241 // loop_pre_header
                  _
                $region251: #{decoder_forward.1} parent=241 // loop_header
                  %s1319 = sphi 0, %s1321
                  %p1320 = scmp.ge.s32.totalorder %s1319, %s1312
                  %s1324 = sphi 0, %s1331
                  %s1325 = sphi %s1315, %s1334
                  %s1326 = sphi %s1317, %s1335
                $region252: #{decoder_forward.1} parent=241 // loop_header_branch
                  %1323 = sbr.rel (%p1320) target = $region256
                $region253: #{decoder_forward.1} parent=241 // loop_body
                  %v1327 = vld [vmem:[%s1325] sm:$0xff]
                  %1328 = vst [vmem:[%s1326] sm:$0xff] %v1327
                  %s1329 = sadd.s32 1, %s1324
                  %p1330 = scmp.ge.s32.totalorder %s1329, %s1312
                  %s1331 = scalar_select %p1330, 0, %s1329
                  %s1332 = smul.u32 %s1331, 8
                  %s1333 = smul.u32 %s1331, 8
                  %s1334 = scalar_lea.vmem %s1315, %s1332 [#allocation7]
                  %s1335 = scalar_lea.vmem %s1317, %s1333
                $region254: #{decoder_forward.1} parent=241 // loop_footer
                  %s1321 = sadd.s32 %s1319, 1
                $region255: #{decoder_forward.1} parent=241 // loop_footer_branch
                  %1318 = sbr.rel target = $region251
                $region256: #{decoder_forward.1} parent=241 // loop_exit
                  _
              $region242: #{decoder_forward.1} parent=219 // pred_fallthru
                _
              // Predicated region
              $region257: #{decoder_forward.1} parent=219 // pred_check
                _
              $region258: #{decoder_forward.1} parent=219 // pred_check_branch
                %1337 = sbr.rel target = $region260
              $region259: #{decoder_forward.1} parent=219 // pred_region
                _
              $region260: #{decoder_forward.1} parent=219 // pred_fallthru
                _
            $region220: #{decoder_forward.1} parent=215 // pred_fallthru
              _
            // Predicated region
            $region221: #{decoder_forward.1} parent=215 // pred_check
              _
            $region222: #{decoder_forward.1} parent=215 // pred_check_branch
              %1240 = sbr.rel target = $region224
            $region223: #{decoder_forward.1} parent=215 // pred_region
              %s1242 = sshrl.u32 %s1229, 1
              // While loop
              $region225: #{decoder_forward.1} parent=223 // loop_pre_header
                _
              $region226: #{decoder_forward.1} parent=223 // loop_header
                %s1244 = sphi 0, %s1246
                %p1245 = scmp.ge.s32.totalorder %s1244, %s1242
                %s1249 = sphi 0, %s1258
                %s1250 = sphi %s874, %s1261
                %s1251 = sphi %s1233, %s1262
              $region227: #{decoder_forward.1} parent=223 // loop_header_branch
                %1248 = sbr.rel (%p1245) target = $region231
              $region228: #{decoder_forward.1} parent=223 // loop_body
                %v1252 = vld [vmem:[%s1250] sm:$0xff]
                %1253 = vst [vmem:[%s1251] sm:$0xff] %v1252
                %v1254 = vld [vmem:[%s1250 + $0x8] sm:$0xff]
                %1255 = vst [vmem:[%s1251 + $0x8] sm:$0xff] %v1254
                %s1256 = sadd.s32 1, %s1249
                %p1257 = scmp.ge.s32.totalorder %s1256, %s1242
                %s1258 = scalar_select %p1257, 0, %s1256
                %s1259 = smul.u32 %s1258, 16
                %s1260 = smul.u32 %s1258, 16
                %s1261 = scalar_lea.vmem %s874, %s1259 [#allocation7]
                %s1262 = scalar_lea.vmem %s1233, %s1260
              $region229: #{decoder_forward.1} parent=223 // loop_footer
                %s1246 = sadd.s32 %s1244, 1
              $region230: #{decoder_forward.1} parent=223 // loop_footer_branch
                %1243 = sbr.rel target = $region226
              $region231: #{decoder_forward.1} parent=223 // loop_exit
                _
              %s1263 = sshrl.u32 %s1229, 1
              %s1264 = sand.u32 %s1229, 1
              %s1265 = smul.u32 %s1263, 2
              %s1266 = smul.u32 8, %s1265
              %s1267 = scalar_lea.vmem %s874, %s1266 [#allocation7]
              %s1268 = smul.u32 8, %s1265
              %s1269 = scalar_lea.vmem %s1233, %s1268
              // While loop
              $region232: #{decoder_forward.1} parent=223 // loop_pre_header
                _
              $region233: #{decoder_forward.1} parent=223 // loop_header
                %s1271 = sphi 0, %s1273
                %p1272 = scmp.ge.s32.totalorder %s1271, %s1264
                %s1276 = sphi 0, %s1283
                %s1277 = sphi %s1267, %s1286
                %s1278 = sphi %s1269, %s1287
              $region234: #{decoder_forward.1} parent=223 // loop_header_branch
                %1275 = sbr.rel (%p1272) target = $region238
              $region235: #{decoder_forward.1} parent=223 // loop_body
                %v1279 = vld [vmem:[%s1277] sm:$0xff]
                %1280 = vst [vmem:[%s1278] sm:$0xff] %v1279
                %s1281 = sadd.s32 1, %s1276
                %p1282 = scmp.ge.s32.totalorder %s1281, %s1264
                %s1283 = scalar_select %p1282, 0, %s1281
                %s1284 = smul.u32 %s1283, 8
                %s1285 = smul.u32 %s1283, 8
                %s1286 = scalar_lea.vmem %s1267, %s1284 [#allocation7]
                %s1287 = scalar_lea.vmem %s1269, %s1285
              $region236: #{decoder_forward.1} parent=223 // loop_footer
                %s1273 = sadd.s32 %s1271, 1
              $region237: #{decoder_forward.1} parent=223 // loop_footer_branch
                %1270 = sbr.rel target = $region233
              $region238: #{decoder_forward.1} parent=223 // loop_exit
                _
            $region224: #{decoder_forward.1} parent=215 // pred_fallthru
              _
          $region216: #{decoder_forward.1} parent=211 // pred_fallthru
            _
          %1338 = vnop
        $region212: #{decoder_forward.1} parent=47 // pred_fallthru
          _
      $region48: #{decoder_forward.1} parent=5 // pred_fallthru
        _
      %p1339 = scmp.le.s32.totalorder 2, %s18
      // Predicated region
      $region261: #{decoder_forward.1} parent=5 // pred_check
        %p1340 = pneg %p1339
      $region262: #{decoder_forward.1} parent=5 // pred_check_branch
        %1342 = sbr.rel (%p1340) target = $region264
      $region263: #{decoder_forward.1} parent=5 // pred_region
        %s1343 = ssub.s32 %s18, 2
        // Predicated region
        $region265: #{decoder_forward.1} parent=263 // pred_check
          %p1344 = pneg %p199
        $region266: #{decoder_forward.1} parent=263 // pred_check_branch
          %1346 = sbr.rel (%p1344) target = $region268
        $region267: #{decoder_forward.1} parent=263 // pred_region
          %s1347 = sand.u32 %s184, 1
          %s1348 = sand.u32 %s184, 1
          %s1349 = smul.addr %s1348, 16
          %s1350 = scalar_lea.vmem [#allocation4], %s1349
        $region268: #{decoder_forward.1} parent=263 // pred_fallthru
          _
        // Predicated region
        $region269: #{decoder_forward.1} parent=263 // pred_check
          %p1351 = pneg %p225
        $region270: #{decoder_forward.1} parent=263 // pred_check_branch
          %1353 = sbr.rel (%p1351) target = $region272
        $region271: #{decoder_forward.1} parent=263 // pred_region
          %s1354 = sand.u32 %s210, 1
          %s1355 = sand.u32 %s210, 1
          %s1356 = smul.addr %s1355, 16
          %s1357 = scalar_lea.vmem [#allocation5], %s1356
        $region272: #{decoder_forward.1} parent=263 // pred_fallthru
          _
        // Predicated region
        $region273: #{decoder_forward.1} parent=263 // pred_check
          %p1358 = pneg %p251
        $region274: #{decoder_forward.1} parent=263 // pred_check_branch
          %1360 = sbr.rel (%p1358) target = $region276
        $region275: #{decoder_forward.1} parent=263 // pred_region
          %s1361 = sand.u32 %s236, 1
          %s1362 = sand.u32 %s236, 1
          %s1363 = smul.addr %s1362, 16
          %s1364 = scalar_lea.vmem [#allocation6], %s1363
        $region276: #{decoder_forward.1} parent=263 // pred_fallthru
          _
        // Predicated region
        $region277: #{decoder_forward.1} parent=263 // pred_check
          %p1365 = pneg %p277
        $region278: #{decoder_forward.1} parent=263 // pred_check_branch
          %1367 = sbr.rel (%p1365) target = $region280
        $region279: #{decoder_forward.1} parent=263 // pred_region
          %s1368 = sand.u32 %s262, 1
          %s1369 = sand.u32 %s262, 1
          %s1370 = smul.addr %s1369, 16
          %s1371 = scalar_lea.vmem [#allocation7], %s1370
        $region280: #{decoder_forward.1} parent=263 // pred_fallthru
          _
      $region264: #{decoder_forward.1} parent=5 // pred_fallthru
        _
    $region6: #{decoder_forward.1} parent=1 // loop_footer
      %s22 = sadd.s32 1, %s18
    $region7: #{decoder_forward.1} parent=1 // loop_footer_branch
      %17 = sbr.rel target = $region3
    $region8: #{decoder_forward.1} parent=1 // loop_exit
      _
    %1372 = vsyncpa [#allocation3], 1
    %s1373 = scalar_lea.sflag [#allocation3], 1
    %1374 = vsyncpa %s1373, 1

</llo_original>
